<compile_context>
chip_gen: v6e
topology: v6e:2x2x1
jax: 0.10.0
libtpu: 0.0.40
codegen_flags: <defaults>
</compile_context>

<pallas_src>
import math

import jax
import jax.numpy as jnp
import numpy as np
from jax import lax
from jax.experimental import pallas as pl
from jax.experimental.pallas import tpu as pltpu


def _vmem_limit_bytes():
    """Generation-aware VMEM budget with headroom (v7x: 64 MiB physical)."""
    try:
        cap = pltpu.get_tpu_info().vmem_capacity_bytes
        return min(int(cap * 3 // 4), 100 * 1024 * 1024)
    except Exception:
        return 64 * 1024 * 1024


def _make_mha_kernel(num_heads, d_k, seq_len, d_model, tq, tkv, compute_dtype):
    H, dk, T, D = num_heads, d_k, seq_len, d_model
    nkv = T // tkv
    cd = compute_dtype

    def kernel(x_ref, wq_ref, bq_ref, wkv_ref, bkv_ref, wo_ref, bo_ref,
               o_ref, kv_ref, ctx_ref):
        qi = pl.program_id(1)

        # ---- K/V projection: once per batch element, reused by all q tiles ----
        @pl.when(qi == 0)
        def _():
            xf = x_ref[0].astype(cd)                              # [T, D]
            kv = jnp.dot(xf, wkv_ref[...],
                         preferred_element_type=jnp.float32) + bkv_ref[...]
            kv_ref[...] = kv.astype(cd)                           # [T, 2D] = K | V

        # ---- Q projection for this query tile (scale folded into W_q/b_q) ----
        q_off = pl.multiple_of(qi * tq, tq)
        xq = x_ref[0, pl.ds(q_off, tq), :].astype(cd)             # [tq, D]
        q = (jnp.dot(xq, wq_ref[...],
                     preferred_element_type=jnp.float32) + bq_ref[...]).astype(cd)

        # ---- per-head flash attention over KV tiles ---------------------------
        for h in range(H):                                        # H is small; static
            q_h = q[:, h * dk:(h + 1) * dk]                       # [tq, dk]

            def kv_body(t, carry, q_h=q_h, h=h):
                m, l, acc = carry
                off = pl.multiple_of(t * tkv, tkv)
                k_t = kv_ref[pl.ds(off, tkv), pl.ds(h * dk, dk)]          # [tkv, dk]
                v_t = kv_ref[pl.ds(off, tkv), pl.ds(D + h * dk, dk)]      # [tkv, dk]
                # Contract on d_k: no K transpose / relayout.
                s = jnp.einsum("qd,kd->qk", q_h, k_t,
                               preferred_element_type=jnp.float32)        # [tq, tkv]
                m_new = jnp.maximum(m, jnp.max(s, axis=-1, keepdims=True))
                alpha = jnp.exp(m - m_new)
                p = jnp.exp(s - m_new)
                l_new = alpha * l + jnp.sum(p, axis=-1, keepdims=True)
                acc_new = alpha * acc + jnp.dot(p.astype(cd), v_t,
                                                preferred_element_type=jnp.float32)
                return m_new, l_new, acc_new

            m0 = jnp.full((tq, 1), -jnp.inf, jnp.float32)
            l0 = jnp.zeros((tq, 1), jnp.float32)
            a0 = jnp.zeros((tq, dk), jnp.float32)
            m, l, acc = lax.fori_loop(0, nkv, kv_body, (m0, l0, a0))

            # Exact reciprocal on a [tq, 1] column — negligible cost, tight numerics.
            ctx = acc * (1.0 / l)                                  # [tq, dk] f32
            # Lane-offset store: concat_h(ctx_h) lives in ctx_ref without a concat.
            ctx_ref[:, pl.ds(h * dk, dk)] = ctx.astype(cd)

        # ---- single full-K output projection ----------------------------------
        out = jnp.dot(ctx_ref[...], wo_ref[...],
                      preferred_element_type=jnp.float32) + bo_ref[...]
        o_ref[0] = out.astype(o_ref.dtype)

    return kernel


def prepare_params(params, num_heads, compute_dtype=jnp.bfloat16):
    """One-time host-side parameter prep.

    Linear weights are stored [d_in, d_out] (kernel computes y = x @ W + b).
    Folds 1/sqrt(d_k) into W_q / b_q, fuses W_k|W_v into one [D, 2D] weight,
    keeps W_o unreshaped (single full-K output matmul in the kernel).
    """
    D = params["wq"].shape[0]
    dk = D // num_heads
    inv = 1.0 / math.sqrt(dk)
    return {
        "wq": (params["wq"] * inv).astype(compute_dtype),                       # [D, D]
        "bq": (params["bq"] * inv).reshape(1, D).astype(jnp.float32),           # [1, D]
        "wkv": jnp.concatenate([params["wk"], params["wv"]],
                               axis=1).astype(compute_dtype),                   # [D, 2D]
        "bkv": jnp.concatenate([params["bk"], params["bv"]]
                               ).reshape(1, 2 * D).astype(jnp.float32),         # [1, 2D]
        "wo": params["wo"].astype(compute_dtype),                               # [D, D]
        "bo": params["bo"].reshape(1, D).astype(jnp.float32),                   # [1, D]
    }


def multi_head_attention_pallas(x, prepared, num_heads, *,
                                q_tile=256, kv_tile=512, out_dtype=None):
    """x: [B, T, d_model] (any float dtype; cast in VMEM). prepared: prepare_params()."""
    B, T, D = x.shape
    assert D % num_heads == 0
    dk = D // num_heads
    cd = prepared["wq"].dtype
    if out_dtype is None:
        out_dtype = cd                      # bf16 output when computing in bf16

    tq = min(q_tile, T)
    tkv = min(kv_tile, T)
    assert T % tq == 0 and T % tkv == 0, "seq_len must be divisible by tile sizes"
    nq = T // tq

    kernel = _make_mha_kernel(num_heads, dk, T, D, tq, tkv, cd)

    # Grid-invariant weights/biases: single-buffered (constant index maps).
    single = pl.Buffered(1)
    weight_specs = [
        pl.BlockSpec((D, D), lambda b, qi: (0, 0), pipeline_mode=single),       # wq
        pl.BlockSpec((1, D), lambda b, qi: (0, 0), pipeline_mode=single),       # bq
        pl.BlockSpec((D, 2 * D), lambda b, qi: (0, 0), pipeline_mode=single),   # wkv
        pl.BlockSpec((1, 2 * D), lambda b, qi: (0, 0), pipeline_mode=single),   # bkv
        pl.BlockSpec((D, D), lambda b, qi: (0, 0), pipeline_mode=single),       # wo
        pl.BlockSpec((1, D), lambda b, qi: (0, 0), pipeline_mode=single),       # bo
    ]

    nbytes = lambda a: int(a.size) * a.dtype.itemsize
    cost = pl.CostEstimate(
        flops=int(B * (8 * T * D * D + 4 * T * T * D)),
        transcendentals=int(B * num_heads * T * T),
        bytes_accessed=int(nbytes(x)
                           + sum(nbytes(v) for v in prepared.values())
                           + B * T * D * jnp.dtype(out_dtype).itemsize),
    )

    out = pl.pallas_call(
        kernel,
        out_shape=jax.ShapeDtypeStruct((B, T, D), out_dtype),
        grid_spec=pltpu.PrefetchScalarGridSpec(
            num_scalar_prefetch=0,
            grid=(B, nq),
            in_specs=[pl.BlockSpec((1, T, D), lambda b, qi: (b, 0, 0))]          # x[b]
                     + weight_specs,
            out_specs=pl.BlockSpec((1, tq, D), lambda b, qi: (b, qi, 0)),
            scratch_shapes=[
                pltpu.VMEM((T, 2 * D), cd),   # K|V projection for current batch elem
                pltpu.VMEM((tq, D), cd),      # per-head context at lane offsets
            ],
        ),
        compiler_params=pltpu.CompilerParams(
            # batch axis sharded across TensorCores; q-tile axis sequential so
            # the per-batch K/V scratch (init at qi==0) carry is valid.
            dimension_semantics=("parallel", "arbitrary"),
            vmem_limit_bytes=_vmem_limit_bytes(),
        ),
        cost_estimate=cost,
    )(x, prepared["wq"], prepared["bq"], prepared["wkv"], prepared["bkv"],
      prepared["wo"], prepared["bo"])
    return out


def multi_head_attention_ref(x, params, num_heads):
    """Pure-JAX f32 reference mirroring the PyTorch module (eval, mask=None)."""
    B, T, D = x.shape
    dk = D // num_heads

    def proj(w, b):
        return x @ w + b

    q = proj(params["wq"], params["bq"]).reshape(B, T, num_heads, dk).transpose(0, 2, 1, 3)
    k = proj(params["wk"], params["bk"]).reshape(B, T, num_heads, dk).transpose(0, 2, 1, 3)
    v = proj(params["wv"], params["bv"]).reshape(B, T, num_heads, dk).transpose(0, 2, 1, 3)

    scores = jnp.einsum("bhtd,bhsd->bhts", q, k) / math.sqrt(dk)
    attn = jax.nn.softmax(scores, axis=-1)
    out = jnp.einsum("bhts,bhsd->bhtd", attn, v)
    out = out.transpose(0, 2, 1, 3).reshape(B, T, D)
    return out @ params["wo"] + params["bo"]


if __name__ == "__main__":
    B, T, d_model, h = 2, 16, 32, 4

    key = jax.random.PRNGKey(0)
    keys = jax.random.split(key, 9)
    scale = 1.0 / math.sqrt(d_model)

    x = jax.random.normal(keys[0], (B, T, d_model), dtype=jnp.float32)
    params = {
        "wq": jax.random.normal(keys[1], (d_model, d_model), jnp.float32) * scale,
        "bq": jax.random.normal(keys[2], (d_model,), jnp.float32) * 0.01,
        "wk": jax.random.normal(keys[3], (d_model, d_model), jnp.float32) * scale,
        "bk": jax.random.normal(keys[4], (d_model,), jnp.float32) * 0.01,
        "wv": jax.random.normal(keys[5], (d_model, d_model), jnp.float32) * scale,
        "bv": jax.random.normal(keys[6], (d_model,), jnp.float32) * 0.01,
        "wo": jax.random.normal(keys[7], (d_model, d_model), jnp.float32) * scale,
        "bo": jax.random.normal(keys[8], (d_model,), jnp.float32) * 0.01,
    }

    ref = jax.block_until_ready(multi_head_attention_ref(x, params, num_heads=h))

    # Config 1: f32 compute / f32 output; small tiles so the q-tile grid axis
    # and the KV fori_loop (flash online softmax) are exercised (grid (2,2),
    # nkv=2).
    prep_f32 = prepare_params(params, h, compute_dtype=jnp.float32)
    out1 = multi_head_attention_pallas(x, prep_f32, num_heads=h,
                                       q_tile=8, kv_tile=8,
                                       out_dtype=jnp.float32)
    out1 = jax.block_until_ready(out1)
    np.testing.assert_allclose(np.asarray(out1), np.asarray(ref),
                               rtol=1e-3, atol=1e-3)

    # Config 2: bf16 MXU operands, bf16 output (production default); full-T
    # tiles. bf16 operand/output rounding dominates the error.
    prep_bf16 = prepare_params(params, h, compute_dtype=jnp.bfloat16)
    out2 = multi_head_attention_pallas(x, prep_bf16, num_heads=h)
    out2 = jax.block_until_ready(out2)
    np.testing.assert_allclose(np.asarray(out2.astype(jnp.float32)),
                               np.asarray(ref), rtol=5e-2, atol=5e-2)

    print("KERNEL_OK")
</pallas_src>

<mosaic_0001>
module attributes {stable_mosaic.version = 11 : i64} {
  func.func @kernel(%arg0: i32, %arg1: i32, %arg2: memref<1x16x32xf32, #tpu.memory_space<vmem>>, %arg3: memref<32x32xf32, #tpu.memory_space<vmem>>, %arg4: memref<1x32xf32, #tpu.memory_space<vmem>>, %arg5: memref<32x64xf32, #tpu.memory_space<vmem>>, %arg6: memref<1x64xf32, #tpu.memory_space<vmem>>, %arg7: memref<32x32xf32, #tpu.memory_space<vmem>>, %arg8: memref<1x32xf32, #tpu.memory_space<vmem>>, %arg9: memref<1x8x32xf32, #tpu.memory_space<vmem>>, %arg10: memref<16x64xf32, #tpu.memory_space<vmem>>, %arg11: memref<8x32xf32, #tpu.memory_space<vmem>>) attributes {dimension_semantics = [#tpu.dimension_semantics<parallel>, #tpu.dimension_semantics<arbitrary>], iteration_bounds = array<i64: 2, 2>, scalar_prefetch = 0 : i64, scratch_operands = 2 : i64, tpu.core_type = #tpu.core_type<tc>, window_params = [{transform_indices = @transform_0, window_bounds = array<i64: 1, 16, 32>}, {pipeline_mode = #tpu.pipeline_mode<synchronous>, transform_indices = @transform_1, window_bounds = array<i64: 32, 32>}, {pipeline_mode = #tpu.pipeline_mode<synchronous>, transform_indices = @transform_2, window_bounds = array<i64: 1, 32>}, {pipeline_mode = #tpu.pipeline_mode<synchronous>, transform_indices = @transform_3, window_bounds = array<i64: 32, 64>}, {pipeline_mode = #tpu.pipeline_mode<synchronous>, transform_indices = @transform_4, window_bounds = array<i64: 1, 64>}, {pipeline_mode = #tpu.pipeline_mode<synchronous>, transform_indices = @transform_5, window_bounds = array<i64: 32, 32>}, {pipeline_mode = #tpu.pipeline_mode<synchronous>, transform_indices = @transform_6, window_bounds = array<i64: 1, 32>}, {transform_indices = @transform_7, window_bounds = array<i64: 1, 8, 32>}]} {
    %c0_i32 = arith.constant 0 : i32
    %0 = arith.cmpi eq, %arg1, %c0_i32 : i32
    %1 = arith.extui %0 : i1 to i32
    %c0_i32_0 = arith.constant 0 : i32
    %2 = arith.cmpi ne, %1, %c0_i32_0 : i32
    scf.if %2 {
      %c0_51 = arith.constant 0 : index
      %c0_52 = arith.constant 0 : index
      %c0_53 = arith.constant 0 : index
      %66 = vector.load %arg2[%c0_51, %c0_52, %c0_53] : memref<1x16x32xf32, #tpu.memory_space<vmem>>, vector<1x16x32xf32>
      %67 = vector.shape_cast %66 : vector<1x16x32xf32> to vector<16x32xf32>
      %c0_54 = arith.constant 0 : index
      %c0_55 = arith.constant 0 : index
      %68 = vector.load %arg5[%c0_54, %c0_55] : memref<32x64xf32, #tpu.memory_space<vmem>>, vector<32x64xf32>
      %cst_56 = arith.constant dense<0.000000e+00> : vector<16x64xf32>
      %69 = tpu.matmul %67, %68, %cst_56 {dimension_numbers = #tpu.dot_dimension_numbers<[1], [0], [0], [1], [0, 0, 1, 1], [], []>} : vector<16x32xf32>, vector<32x64xf32>, vector<16x64xf32> -> vector<16x64xf32>
      %c0_57 = arith.constant 0 : index
      %c0_58 = arith.constant 0 : index
      %70 = vector.load %arg6[%c0_57, %c0_58] : memref<1x64xf32, #tpu.memory_space<vmem>>, vector<1x64xf32>
      %71 = vector.broadcast %70 : vector<1x64xf32> to vector<16x64xf32>
      %72 = arith.addf %69, %71 : vector<16x64xf32>
      %c0_59 = arith.constant 0 : index
      %c0_60 = arith.constant 0 : index
      %73 = vector.load %arg10[%c0_59, %c0_60] : memref<16x64xf32, #tpu.memory_space<vmem>>, vector<16x64xf32>
      tpu.vector_store %arg10[%c0_59, %c0_60], %72 {strides = array<i32>} : memref<16x64xf32, #tpu.memory_space<vmem>>, vector<16x64xf32>,
    } else {
    }
    %c8_i32 = arith.constant 8 : i32
    %3 = arith.muli %arg1, %c8_i32 : i32
    %4 = tpu.assume_multiple %3, 8 : i32
    %c0 = arith.constant 0 : index
    %5 = arith.index_cast %4 : i32 to index
    %c0_1 = arith.constant 0 : index
    %6 = vector.load %arg2[%c0, %5, %c0_1] : memref<1x16x32xf32, #tpu.memory_space<vmem>>, vector<1x8x32xf32>
    %7 = vector.shape_cast %6 : vector<1x8x32xf32> to vector<8x32xf32>
    %c0_2 = arith.constant 0 : index
    %c0_3 = arith.constant 0 : index
    %8 = vector.load %arg3[%c0_2, %c0_3] : memref<32x32xf32, #tpu.memory_space<vmem>>, vector<32x32xf32>
    %cst = arith.constant dense<0.000000e+00> : vector<8x32xf32>
    %9 = tpu.matmul %7, %8, %cst {dimension_numbers = #tpu.dot_dimension_numbers<[1], [0], [0], [1], [0, 0, 1, 1], [], []>} : vector<8x32xf32>, vector<32x32xf32>, vector<8x32xf32> -> vector<8x32xf32>
    %c0_4 = arith.constant 0 : index
    %c0_5 = arith.constant 0 : index
    %10 = vector.load %arg4[%c0_4, %c0_5] : memref<1x32xf32, #tpu.memory_space<vmem>>, vector<1x32xf32>
    %11 = vector.broadcast %10 : vector<1x32xf32> to vector<8x32xf32>
    %12 = arith.addf %9, %11 : vector<8x32xf32>
    %13 = vector.extract_strided_slice %12 {offsets = [0, 0], sizes = [8, 8], strides = [1, 1]} : vector<8x32xf32> to vector<8x8xf32>
    %cst_6 = arith.constant 0xFF800000 : f32
    %14 = vector.broadcast %cst_6 : f32 to vector<8x1xf32>
    %cst_7 = arith.constant 0.000000e+00 : f32
    %15 = vector.broadcast %cst_7 : f32 to vector<8x1xf32>
    %cst_8 = arith.constant 0.000000e+00 : f32
    %16 = vector.broadcast %cst_8 : f32 to vector<8x8xf32>
    %c0_i32_9 = arith.constant 0 : i32
    %c2_i32 = arith.constant 2 : i32
    %17 = arith.addi %c0_i32_9, %c2_i32 : i32
    %c1_i32 = arith.constant 1 : i32
    %18:3 = scf.for %arg12 = %c0_i32_9 to %17 step %c1_i32 iter_args(%arg13 = %14, %arg14 = %15, %arg15 = %16) -> (vector<8x1xf32>, vector<8x1xf32>, vector<8x8xf32>)  : i32 {
      %c8_i32_51 = arith.constant 8 : i32
      %66 = arith.muli %arg12, %c8_i32_51 : i32
      %67 = tpu.assume_multiple %66, 8 : i32
      %68 = arith.index_cast %67 : i32 to index
      %c0_52 = arith.constant 0 : index
      %69 = vector.load %arg10[%68, %c0_52] : memref<16x64xf32, #tpu.memory_space<vmem>>, vector<8x8xf32>
      %70 = arith.index_cast %67 : i32 to index
      %c32 = arith.constant 32 : index
      %71 = vector.load %arg10[%70, %c32] : memref<16x64xf32, #tpu.memory_space<vmem>>, vector<8x8xf32>
      "tpu.trace_start"() <{level = 10 : i32, message = "qd,kd->qk"}> : () -> ()
      %cst_53 = arith.constant dense<0.000000e+00> : vector<8x8xf32>
      %72 = tpu.matmul %13, %69, %cst_53 {dimension_numbers = #tpu.dot_dimension_numbers<[1], [1], [0], [0], [0, 0, 1, 0], [], []>} : vector<8x8xf32>, vector<8x8xf32>, vector<8x8xf32> -> vector<8x8xf32>
      "tpu.trace_stop"() : () -> ()
      %cst_54 = arith.constant dense<0xFF800000> : vector<8xf32>
      %73 = vector.multi_reduction <maximumf>, %72, %cst_54 [1] : vector<8x8xf32> to vector<8xf32>
      %74 = vector.shape_cast %73 : vector<8xf32> to vector<8x1xf32>
      %75 = arith.maximumf %arg13, %74 : vector<8x1xf32>
      %76 = arith.subf %arg13, %75 : vector<8x1xf32>
      %77 = math.exp %76 : vector<8x1xf32>
      %78 = vector.broadcast %75 : vector<8x1xf32> to vector<8x8xf32>
      %79 = arith.subf %72, %78 : vector<8x8xf32>
      %80 = math.exp %79 : vector<8x8xf32>
      %81 = arith.mulf %77, %arg14 : vector<8x1xf32>
      %cst_55 = arith.constant dense<0.000000e+00> : vector<8xf32>
      %82 = vector.multi_reduction <add>, %80, %cst_55 [1] : vector<8x8xf32> to vector<8xf32>
      %83 = vector.shape_cast %82 : vector<8xf32> to vector<8x1xf32>
      %84 = arith.addf %81, %83 : vector<8x1xf32>
      %85 = vector.broadcast %77 : vector<8x1xf32> to vector<8x8xf32>
      %86 = arith.mulf %85, %arg15 : vector<8x8xf32>
      %cst_56 = arith.constant dense<0.000000e+00> : vector<8x8xf32>
      %87 = tpu.matmul %80, %71, %cst_56 {dimension_numbers = #tpu.dot_dimension_numbers<[1], [0], [0], [1], [0, 0, 1, 1], [], []>} : vector<8x8xf32>, vector<8x8xf32>, vector<8x8xf32> -> vector<8x8xf32>
      %88 = arith.addf %86, %87 : vector<8x8xf32>
      scf.yield %75, %84, %88 : vector<8x1xf32>, vector<8x1xf32>, vector<8x8xf32>
    }
    %c2_i32_10 = arith.constant 2 : i32
    %cst_11 = arith.constant 1.000000e+00 : f32
    %19 = vector.broadcast %cst_11 : f32 to vector<8x1xf32>
    %20 = arith.divf %19, %18#1 : vector<8x1xf32>
    %21 = vector.broadcast %20 : vector<8x1xf32> to vector<8x8xf32>
    %22 = arith.mulf %18#2, %21 : vector<8x8xf32>
    %c0_12 = arith.constant 0 : index
    %c0_13 = arith.constant 0 : index
    %23 = vector.load %arg11[%c0_12, %c0_13] : memref<8x32xf32, #tpu.memory_space<vmem>>, vector<8x8xf32>
    tpu.vector_store %arg11[%c0_12, %c0_13], %22 {strides = array<i32>} : memref<8x32xf32, #tpu.memory_space<vmem>>, vector<8x8xf32>,
    %24 = vector.extract_strided_slice %12 {offsets = [0, 8], sizes = [8, 8], strides = [1, 1]} : vector<8x32xf32> to vector<8x8xf32>
    %cst_14 = arith.constant 0xFF800000 : f32
    %25 = vector.broadcast %cst_14 : f32 to vector<8x1xf32>
    %cst_15 = arith.constant 0.000000e+00 : f32
    %26 = vector.broadcast %cst_15 : f32 to vector<8x1xf32>
    %cst_16 = arith.constant 0.000000e+00 : f32
    %27 = vector.broadcast %cst_16 : f32 to vector<8x8xf32>
    %c0_i32_17 = arith.constant 0 : i32
    %c2_i32_18 = arith.constant 2 : i32
    %28 = arith.addi %c0_i32_17, %c2_i32_18 : i32
    %c1_i32_19 = arith.constant 1 : i32
    %29:3 = scf.for %arg12 = %c0_i32_17 to %28 step %c1_i32_19 iter_args(%arg13 = %25, %arg14 = %26, %arg15 = %27) -> (vector<8x1xf32>, vector<8x1xf32>, vector<8x8xf32>)  : i32 {
      %c8_i32_51 = arith.constant 8 : i32
      %66 = arith.muli %arg12, %c8_i32_51 : i32
      %67 = tpu.assume_multiple %66, 8 : i32
      %68 = arith.index_cast %67 : i32 to index
      %c8_52 = arith.constant 8 : index
      %69 = vector.load %arg10[%68, %c8_52] : memref<16x64xf32, #tpu.memory_space<vmem>>, vector<8x8xf32>
      %70 = arith.index_cast %67 : i32 to index
      %c40 = arith.constant 40 : index
      %71 = vector.load %arg10[%70, %c40] : memref<16x64xf32, #tpu.memory_space<vmem>>, vector<8x8xf32>
      "tpu.trace_start"() <{level = 10 : i32, message = "qd,kd->qk"}> : () -> ()
      %cst_53 = arith.constant dense<0.000000e+00> : vector<8x8xf32>
      %72 = tpu.matmul %24, %69, %cst_53 {dimension_numbers = #tpu.dot_dimension_numbers<[1], [1], [0], [0], [0, 0, 1, 0], [], []>} : vector<8x8xf32>, vector<8x8xf32>, vector<8x8xf32> -> vector<8x8xf32>
      "tpu.trace_stop"() : () -> ()
      %cst_54 = arith.constant dense<0xFF800000> : vector<8xf32>
      %73 = vector.multi_reduction <maximumf>, %72, %cst_54 [1] : vector<8x8xf32> to vector<8xf32>
      %74 = vector.shape_cast %73 : vector<8xf32> to vector<8x1xf32>
      %75 = arith.maximumf %arg13, %74 : vector<8x1xf32>
      %76 = arith.subf %arg13, %75 : vector<8x1xf32>
      %77 = math.exp %76 : vector<8x1xf32>
      %78 = vector.broadcast %75 : vector<8x1xf32> to vector<8x8xf32>
      %79 = arith.subf %72, %78 : vector<8x8xf32>
      %80 = math.exp %79 : vector<8x8xf32>
      %81 = arith.mulf %77, %arg14 : vector<8x1xf32>
      %cst_55 = arith.constant dense<0.000000e+00> : vector<8xf32>
      %82 = vector.multi_reduction <add>, %80, %cst_55 [1] : vector<8x8xf32> to vector<8xf32>
      %83 = vector.shape_cast %82 : vector<8xf32> to vector<8x1xf32>
      %84 = arith.addf %81, %83 : vector<8x1xf32>
      %85 = vector.broadcast %77 : vector<8x1xf32> to vector<8x8xf32>
      %86 = arith.mulf %85, %arg15 : vector<8x8xf32>
      %cst_56 = arith.constant dense<0.000000e+00> : vector<8x8xf32>
      %87 = tpu.matmul %80, %71, %cst_56 {dimension_numbers = #tpu.dot_dimension_numbers<[1], [0], [0], [1], [0, 0, 1, 1], [], []>} : vector<8x8xf32>, vector<8x8xf32>, vector<8x8xf32> -> vector<8x8xf32>
      %88 = arith.addf %86, %87 : vector<8x8xf32>
      scf.yield %75, %84, %88 : vector<8x1xf32>, vector<8x1xf32>, vector<8x8xf32>
    }
    %c2_i32_20 = arith.constant 2 : i32
    %cst_21 = arith.constant 1.000000e+00 : f32
    %30 = vector.broadcast %cst_21 : f32 to vector<8x1xf32>
    %31 = arith.divf %30, %29#1 : vector<8x1xf32>
    %32 = vector.broadcast %31 : vector<8x1xf32> to vector<8x8xf32>
    %33 = arith.mulf %29#2, %32 : vector<8x8xf32>
    %c0_22 = arith.constant 0 : index
    %c8 = arith.constant 8 : index
    %34 = vector.load %arg11[%c0_22, %c8] : memref<8x32xf32, #tpu.memory_space<vmem>>, vector<8x8xf32>
    tpu.vector_store %arg11[%c0_22, %c8], %33 {strides = array<i32>} : memref<8x32xf32, #tpu.memory_space<vmem>>, vector<8x8xf32>,
    %35 = vector.extract_strided_slice %12 {offsets = [0, 16], sizes = [8, 8], strides = [1, 1]} : vector<8x32xf32> to vector<8x8xf32>
    %cst_23 = arith.constant 0xFF800000 : f32
    %36 = vector.broadcast %cst_23 : f32 to vector<8x1xf32>
    %cst_24 = arith.constant 0.000000e+00 : f32
    %37 = vector.broadcast %cst_24 : f32 to vector<8x1xf32>
    %cst_25 = arith.constant 0.000000e+00 : f32
    %38 = vector.broadcast %cst_25 : f32 to vector<8x8xf32>
    %c0_i32_26 = arith.constant 0 : i32
    %c2_i32_27 = arith.constant 2 : i32
    %39 = arith.addi %c0_i32_26, %c2_i32_27 : i32
    %c1_i32_28 = arith.constant 1 : i32
    %40:3 = scf.for %arg12 = %c0_i32_26 to %39 step %c1_i32_28 iter_args(%arg13 = %36, %arg14 = %37, %arg15 = %38) -> (vector<8x1xf32>, vector<8x1xf32>, vector<8x8xf32>)  : i32 {
      %c8_i32_51 = arith.constant 8 : i32
      %66 = arith.muli %arg12, %c8_i32_51 : i32
      %67 = tpu.assume_multiple %66, 8 : i32
      %68 = arith.index_cast %67 : i32 to index
      %c16_52 = arith.constant 16 : index
      %69 = vector.load %arg10[%68, %c16_52] : memref<16x64xf32, #tpu.memory_space<vmem>>, vector<8x8xf32>
      %70 = arith.index_cast %67 : i32 to index
      %c48 = arith.constant 48 : index
      %71 = vector.load %arg10[%70, %c48] : memref<16x64xf32, #tpu.memory_space<vmem>>, vector<8x8xf32>
      "tpu.trace_start"() <{level = 10 : i32, message = "qd,kd->qk"}> : () -> ()
      %cst_53 = arith.constant dense<0.000000e+00> : vector<8x8xf32>
      %72 = tpu.matmul %35, %69, %cst_53 {dimension_numbers = #tpu.dot_dimension_numbers<[1], [1], [0], [0], [0, 0, 1, 0], [], []>} : vector<8x8xf32>, vector<8x8xf32>, vector<8x8xf32> -> vector<8x8xf32>
      "tpu.trace_stop"() : () -> ()
      %cst_54 = arith.constant dense<0xFF800000> : vector<8xf32>
      %73 = vector.multi_reduction <maximumf>, %72, %cst_54 [1] : vector<8x8xf32> to vector<8xf32>
      %74 = vector.shape_cast %73 : vector<8xf32> to vector<8x1xf32>
      %75 = arith.maximumf %arg13, %74 : vector<8x1xf32>
      %76 = arith.subf %arg13, %75 : vector<8x1xf32>
      %77 = math.exp %76 : vector<8x1xf32>
      %78 = vector.broadcast %75 : vector<8x1xf32> to vector<8x8xf32>
      %79 = arith.subf %72, %78 : vector<8x8xf32>
      %80 = math.exp %79 : vector<8x8xf32>
      %81 = arith.mulf %77, %arg14 : vector<8x1xf32>
      %cst_55 = arith.constant dense<0.000000e+00> : vector<8xf32>
      %82 = vector.multi_reduction <add>, %80, %cst_55 [1] : vector<8x8xf32> to vector<8xf32>
      %83 = vector.shape_cast %82 : vector<8xf32> to vector<8x1xf32>
      %84 = arith.addf %81, %83 : vector<8x1xf32>
      %85 = vector.broadcast %77 : vector<8x1xf32> to vector<8x8xf32>
      %86 = arith.mulf %85, %arg15 : vector<8x8xf32>
      %cst_56 = arith.constant dense<0.000000e+00> : vector<8x8xf32>
      %87 = tpu.matmul %80, %71, %cst_56 {dimension_numbers = #tpu.dot_dimension_numbers<[1], [0], [0], [1], [0, 0, 1, 1], [], []>} : vector<8x8xf32>, vector<8x8xf32>, vector<8x8xf32> -> vector<8x8xf32>
      %88 = arith.addf %86, %87 : vector<8x8xf32>
      scf.yield %75, %84, %88 : vector<8x1xf32>, vector<8x1xf32>, vector<8x8xf32>
    }
    %c2_i32_29 = arith.constant 2 : i32
    %cst_30 = arith.constant 1.000000e+00 : f32
    %41 = vector.broadcast %cst_30 : f32 to vector<8x1xf32>
    %42 = arith.divf %41, %40#1 : vector<8x1xf32>
    %43 = vector.broadcast %42 : vector<8x1xf32> to vector<8x8xf32>
    %44 = arith.mulf %40#2, %43 : vector<8x8xf32>
    %c0_31 = arith.constant 0 : index
    %c16 = arith.constant 16 : index
    %45 = vector.load %arg11[%c0_31, %c16] : memref<8x32xf32, #tpu.memory_space<vmem>>, vector<8x8xf32>
    tpu.vector_store %arg11[%c0_31, %c16], %44 {strides = array<i32>} : memref<8x32xf32, #tpu.memory_space<vmem>>, vector<8x8xf32>,
    %46 = vector.extract_strided_slice %12 {offsets = [0, 24], sizes = [8, 8], strides = [1, 1]} : vector<8x32xf32> to vector<8x8xf32>
    %cst_32 = arith.constant 0xFF800000 : f32
    %47 = vector.broadcast %cst_32 : f32 to vector<8x1xf32>
    %cst_33 = arith.constant 0.000000e+00 : f32
    %48 = vector.broadcast %cst_33 : f32 to vector<8x1xf32>
    %cst_34 = arith.constant 0.000000e+00 : f32
    %49 = vector.broadcast %cst_34 : f32 to vector<8x8xf32>
    %c0_i32_35 = arith.constant 0 : i32
    %c2_i32_36 = arith.constant 2 : i32
    %50 = arith.addi %c0_i32_35, %c2_i32_36 : i32
    %c1_i32_37 = arith.constant 1 : i32
    %51:3 = scf.for %arg12 = %c0_i32_35 to %50 step %c1_i32_37 iter_args(%arg13 = %47, %arg14 = %48, %arg15 = %49) -> (vector<8x1xf32>, vector<8x1xf32>, vector<8x8xf32>)  : i32 {
      %c8_i32_51 = arith.constant 8 : i32
      %66 = arith.muli %arg12, %c8_i32_51 : i32
      %67 = tpu.assume_multiple %66, 8 : i32
      %68 = arith.index_cast %67 : i32 to index
      %c24_52 = arith.constant 24 : index
      %69 = vector.load %arg10[%68, %c24_52] : memref<16x64xf32, #tpu.memory_space<vmem>>, vector<8x8xf32>
      %70 = arith.index_cast %67 : i32 to index
      %c56 = arith.constant 56 : index
      %71 = vector.load %arg10[%70, %c56] : memref<16x64xf32, #tpu.memory_space<vmem>>, vector<8x8xf32>
      "tpu.trace_start"() <{level = 10 : i32, message = "qd,kd->qk"}> : () -> ()
      %cst_53 = arith.constant dense<0.000000e+00> : vector<8x8xf32>
      %72 = tpu.matmul %46, %69, %cst_53 {dimension_numbers = #tpu.dot_dimension_numbers<[1], [1], [0], [0], [0, 0, 1, 0], [], []>} : vector<8x8xf32>, vector<8x8xf32>, vector<8x8xf32> -> vector<8x8xf32>
      "tpu.trace_stop"() : () -> ()
      %cst_54 = arith.constant dense<0xFF800000> : vector<8xf32>
      %73 = vector.multi_reduction <maximumf>, %72, %cst_54 [1] : vector<8x8xf32> to vector<8xf32>
      %74 = vector.shape_cast %73 : vector<8xf32> to vector<8x1xf32>
      %75 = arith.maximumf %arg13, %74 : vector<8x1xf32>
      %76 = arith.subf %arg13, %75 : vector<8x1xf32>
      %77 = math.exp %76 : vector<8x1xf32>
      %78 = vector.broadcast %75 : vector<8x1xf32> to vector<8x8xf32>
      %79 = arith.subf %72, %78 : vector<8x8xf32>
      %80 = math.exp %79 : vector<8x8xf32>
      %81 = arith.mulf %77, %arg14 : vector<8x1xf32>
      %cst_55 = arith.constant dense<0.000000e+00> : vector<8xf32>
      %82 = vector.multi_reduction <add>, %80, %cst_55 [1] : vector<8x8xf32> to vector<8xf32>
      %83 = vector.shape_cast %82 : vector<8xf32> to vector<8x1xf32>
      %84 = arith.addf %81, %83 : vector<8x1xf32>
      %85 = vector.broadcast %77 : vector<8x1xf32> to vector<8x8xf32>
      %86 = arith.mulf %85, %arg15 : vector<8x8xf32>
      %cst_56 = arith.constant dense<0.000000e+00> : vector<8x8xf32>
      %87 = tpu.matmul %80, %71, %cst_56 {dimension_numbers = #tpu.dot_dimension_numbers<[1], [0], [0], [1], [0, 0, 1, 1], [], []>} : vector<8x8xf32>, vector<8x8xf32>, vector<8x8xf32> -> vector<8x8xf32>
      %88 = arith.addf %86, %87 : vector<8x8xf32>
      scf.yield %75, %84, %88 : vector<8x1xf32>, vector<8x1xf32>, vector<8x8xf32>
    }
    %c2_i32_38 = arith.constant 2 : i32
    %cst_39 = arith.constant 1.000000e+00 : f32
    %52 = vector.broadcast %cst_39 : f32 to vector<8x1xf32>
    %53 = arith.divf %52, %51#1 : vector<8x1xf32>
    %54 = vector.broadcast %53 : vector<8x1xf32> to vector<8x8xf32>
    %55 = arith.mulf %51#2, %54 : vector<8x8xf32>
    %c0_40 = arith.constant 0 : index
    %c24 = arith.constant 24 : index
    %56 = vector.load %arg11[%c0_40, %c24] : memref<8x32xf32, #tpu.memory_space<vmem>>, vector<8x8xf32>
    tpu.vector_store %arg11[%c0_40, %c24], %55 {strides = array<i32>} : memref<8x32xf32, #tpu.memory_space<vmem>>, vector<8x8xf32>,
    %c0_41 = arith.constant 0 : index
    %c0_42 = arith.constant 0 : index
    %57 = vector.load %arg11[%c0_41, %c0_42] : memref<8x32xf32, #tpu.memory_space<vmem>>, vector<8x32xf32>
    %c0_43 = arith.constant 0 : index
    %c0_44 = arith.constant 0 : index
    %58 = vector.load %arg7[%c0_43, %c0_44] : memref<32x32xf32, #tpu.memory_space<vmem>>, vector<32x32xf32>
    %cst_45 = arith.constant dense<0.000000e+00> : vector<8x32xf32>
    %59 = tpu.matmul %57, %58, %cst_45 {dimension_numbers = #tpu.dot_dimension_numbers<[1], [0], [0], [1], [0, 0, 1, 1], [], []>} : vector<8x32xf32>, vector<32x32xf32>, vector<8x32xf32> -> vector<8x32xf32>
    %c0_46 = arith.constant 0 : index
    %c0_47 = arith.constant 0 : index
    %60 = vector.load %arg8[%c0_46, %c0_47] : memref<1x32xf32, #tpu.memory_space<vmem>>, vector<1x32xf32>
    %61 = vector.broadcast %60 : vector<1x32xf32> to vector<8x32xf32>
    %62 = arith.addf %59, %61 : vector<8x32xf32>
    %c0_48 = arith.constant 0 : index
    %c0_49 = arith.constant 0 : index
    %c0_50 = arith.constant 0 : index
    %63 = vector.load %arg9[%c0_48, %c0_49, %c0_50] : memref<1x8x32xf32, #tpu.memory_space<vmem>>, vector<1x8x32xf32>
    %64 = vector.shape_cast %63 : vector<1x8x32xf32> to vector<8x32xf32>
    %65 = vector.shape_cast %62 : vector<8x32xf32> to vector<1x8x32xf32>
    tpu.vector_store %arg9[%c0_48, %c0_49, %c0_50], %65 {strides = array<i32>} : memref<1x8x32xf32, #tpu.memory_space<vmem>>, vector<1x8x32xf32>,
    return
  }
  func.func @transform_0(%arg0: i32, %arg1: i32) -> (i32, i32, i32) {
    %c0_i32 = arith.constant 0 : i32
    %c0_i32_0 = arith.constant 0 : i32
    %c0_i32_1 = arith.constant 0 : i32
    return %arg0, %c0_i32, %c0_i32_0 : i32, i32, i32
  }
  func.func @transform_1(%arg0: i32, %arg1: i32) -> (i32, i32) {
    %c0_i32 = arith.constant 0 : i32
    %c0_i32_0 = arith.constant 0 : i32
    %c0_i32_1 = arith.constant 0 : i32
    return %c0_i32, %c0_i32_0 : i32, i32
  }
  func.func @transform_2(%arg0: i32, %arg1: i32) -> (i32, i32) {
    %c0_i32 = arith.constant 0 : i32
    %c0_i32_0 = arith.constant 0 : i32
    %c0_i32_1 = arith.constant 0 : i32
    return %c0_i32, %c0_i32_0 : i32, i32
  }
  func.func @transform_3(%arg0: i32, %arg1: i32) -> (i32, i32) {
    %c0_i32 = arith.constant 0 : i32
    %c0_i32_0 = arith.constant 0 : i32
    %c0_i32_1 = arith.constant 0 : i32
    return %c0_i32, %c0_i32_0 : i32, i32
  }
  func.func @transform_4(%arg0: i32, %arg1: i32) -> (i32, i32) {
    %c0_i32 = arith.constant 0 : i32
    %c0_i32_0 = arith.constant 0 : i32
    %c0_i32_1 = arith.constant 0 : i32
    return %c0_i32, %c0_i32_0 : i32, i32
  }
  func.func @transform_5(%arg0: i32, %arg1: i32) -> (i32, i32) {
    %c0_i32 = arith.constant 0 : i32
    %c0_i32_0 = arith.constant 0 : i32
    %c0_i32_1 = arith.constant 0 : i32
    return %c0_i32, %c0_i32_0 : i32, i32
  }
  func.func @transform_6(%arg0: i32, %arg1: i32) -> (i32, i32) {
    %c0_i32 = arith.constant 0 : i32
    %c0_i32_0 = arith.constant 0 : i32
    %c0_i32_1 = arith.constant 0 : i32
    return %c0_i32, %c0_i32_0 : i32, i32
  }
  func.func @transform_7(%arg0: i32, %arg1: i32) -> (i32, i32, i32) {
    %c0_i32 = arith.constant 0 : i32
    %c0_i32_0 = arith.constant 0 : i32
    return %arg0, %arg1, %c0_i32 : i32, i32, i32
  }
}

</mosaic_0001>

<llo_original>
// kernel: tpu_custom_call.1
$region0: #{tpu_custom_call.1}
  #allocation0 [shape = 'u32[]', space=smem, size = 0x4, offset = 0x4, fixed_abs, tag = 'smem constant byte address 0x4 - core index']
  #allocation1 [shape = 'u32[144,128]{1,0:T(1,128)}', space=vmem, size = 0x12000, scoped, tag = 'internal scratch']
  #allocation2 [shape = 'f32[16,64]{1,0:T(8,128)}', space=vmem, size = 0x2000, scoped, tag = 'scratch operand']
  #allocation3 [shape = 'f32[8,32]{1,0:T(8,128)}', space=vmem, size = 0x1000, scoped, tag = 'scratch operand']
  %s0 = inlined_call_operand.hbm [shape: f32[2,16,32], index: 0, kind: input, shape index: {}]
  %s1 = inlined_call_operand.hbm [shape: f32[32,32], index: 1, kind: input, shape index: {}]
  %s2 = inlined_call_operand.vmem [shape: f32[1,32], index: 2, kind: input, shape index: {}]
  %s3 = inlined_call_operand.hbm [shape: f32[32,64], index: 3, kind: input, shape index: {}]
  %s4 = inlined_call_operand.vmem [shape: f32[1,64], index: 4, kind: input, shape index: {}]
  %s5 = inlined_call_operand.hbm [shape: f32[32,32], index: 5, kind: input, shape index: {}]
  %s6 = inlined_call_operand.vmem [shape: f32[1,32], index: 6, kind: input, shape index: {}]
  %s7 = inlined_call_operand.hbm [shape: f32[2,16,32], index: 7, kind: output, shape index: {}]
  %s8 = sld [smem:[#allocation0]]
  $region109: #{tpu_custom_call.1} parent=0
    _
  %s10 = ssub.s32 1, %s8
  %s11 = scalar_select 0, %s10, %s8
  $region1: #{tpu_custom_call.1} parent=0
    #allocation4 [shape = 'u8[16384]{0}', space=vmem, size = 0x4000, scoped, tag = 'input window, operand 0']
    #allocation5 [shape = 's32[2]{0}', space=sflag, size = 0x8, scoped, tag = 'scoped memory for tpu_custom_call.1']
    #allocation6 [shape = 's32[2]{0}', space=sflag, size = 0x8, scoped, tag = 'scoped memory for tpu_custom_call.1']
    #allocation7 [shape = 'u8[16384]{0}', space=vmem, size = 0x4000, scoped, tag = 'input window, operand 1, single buffered']
    #allocation8 [shape = 's32[1]{0}', space=sflag, size = 0x4, scoped, tag = 'scoped memory for tpu_custom_call.1']
    #allocation9 [shape = 'u8[16384]{0}', space=vmem, size = 0x4000, scoped, tag = 'input window, operand 3, single buffered']
    #allocation10 [shape = 'u8[16384]{0}', space=vmem, size = 0x4000, scoped, tag = 'input window, operand 5, single buffered']
    #allocation11 [shape = 's32[1]{0}', space=sflag, size = 0x4, scoped, tag = 'scoped memory for tpu_custom_call.1']
    #allocation12 [shape = 'u8[8192]{0}', space=vmem, size = 0x2000, scoped, tag = 'output window, operand 0']
    %12 = vsyncpa [#allocation5], 0
    %s13 = scalar_lea.sflag [#allocation5], 1
    %14 = vsyncpa %s13, 0
    %15 = vsyncpa [#allocation8], 0
    %16 = vsyncpa [#allocation11], 0
    %17 = vsyncpa [#allocation6], 0
    %s18 = scalar_lea.sflag [#allocation6], 1
    %19 = vsyncpa %s18, 0
    loop: start=0, step=1, limit=6
    $region2: #{tpu_custom_call.1} parent=1 // loop_pre_header
      _
    $region3: #{tpu_custom_call.1} parent=1 // loop_header
      %s21 = sphi 0, %s25
      %p22 = scmp.ge.s32.totalorder %s21, 6
      %s28 = sphi 0, %s40
      %s29 = sphi 0, %s36
      %s30 = sphi 0, %s28
      %s31 = sphi 0, %s29
      %s32 = sphi 0, %s30
      %s33 = sphi 0, %s31
      %s43 = sphi 0, %s45
      %s46 = sphi 0, %s43
      %s47 = sphi 0, %s46
      %s63 = sphi 0, %s47
      %s67 = sphi 0, %s67
      %s69 = sphi 0, %s67
      %s70 = sphi 0, %s69
      %s84 = sphi 0, %s70
      %s88 = sphi 0, %s88
      %s90 = sphi 0, %s88
      %s91 = sphi 0, %s90
      %s105 = sphi 0, %s91
      %s109 = sphi 0, %s109
      %s111 = sphi 0, %s109
      %s112 = sphi 0, %s111
      %s126 = sphi 0, %s112
      %s130 = sphi 0, %s130
      %s132 = sphi 0, %s130
      %s133 = sphi 0, %s132
      %s147 = sphi 0, %s133
      %s151 = sphi 0, %s151
      %s153 = sphi 0, %s151
      %s154 = sphi 0, %s153
      %s168 = sphi 0, %s154
      %s172 = sphi 0, %s172
      %s174 = sphi 0, %s172
      %s175 = sphi 0, %s174
      %s189 = sphi 0, %s175
      %s197 = sphi 0, %s199
      %s200 = sphi 0, %s197
      %s201 = sphi 0, %s200
      %s217 = sphi 0, %s201
    $region4: #{tpu_custom_call.1} parent=1 // loop_header_branch
      %24 = sbr.rel (%p22) target = $region8
    $region5: #{tpu_custom_call.1} parent=1 // loop_body
      %s26 = ssub.s32 %s21, 1
      %s27 = ssub.s32 %s21, 2
      %s34 = sadd.s32 1, %s29
      %p35 = scmp.ge.s32.totalorder %s34, 2
      %s36 = scalar_select %p35, 0, %s34
      %s37 = sadd.s32 1, %s28
      %s38 = scalar_select %p35, %s37, %s28
      %p39 = scmp.ge.s32.totalorder %s38, 2
      %s40 = scalar_select %p39, 0, %s38
      %s41 = ssub.s32 %s28, %s40
      %p42 = scmp.eq.s32.totalorder %s41, 0
      %s44 = sadd.s32 %s43, 1
      %s45 = scalar_select %p42, %s43, %s44
      %p48 = pneg %p42
      %p49 = scmp.eq.s32.totalorder %s21, 3
      %p50 = por %p48, %p49
      %p51 = scmp.ne.s32.totalorder %s43, %s46
      %p52 = scmp.eq.s32.totalorder %s21, 0
      %p53 = por %p51, %p52
      %p54 = scmp.ne.s32.totalorder %s43, %s46
      %p55 = scmp.eq.s32.totalorder %s26, 3
      %p56 = por %p54, %p55
      %p57 = scmp.ne.s32.totalorder %s46, %s47
      %p58 = scmp.eq.s32.totalorder %s26, 0
      %p59 = por %p57, %p58
      %p60 = scmp.ne.s32.totalorder %s46, %s47
      %p61 = scmp.eq.s32.totalorder %s27, 3
      %p62 = por %p60, %p61
      %p64 = scmp.ne.s32.totalorder %s47, %s63
      %p65 = scmp.eq.s32.totalorder %s27, 0
      %p66 = por %p64, %p65
      %s68 = sadd.s32 %s67, 1
      %p71 = scmp.eq.s32.totalorder %s21, 3
      %p72 = scmp.ne.s32.totalorder %s67, %s69
      %p73 = scmp.eq.s32.totalorder %s21, 0
      %p74 = por %p72, %p73
      %p75 = scmp.ne.s32.totalorder %s67, %s69
      %p76 = scmp.eq.s32.totalorder %s26, 3
      %p77 = por %p75, %p76
      %p78 = scmp.ne.s32.totalorder %s69, %s70
      %p79 = scmp.eq.s32.totalorder %s26, 0
      %p80 = por %p78, %p79
      %p81 = scmp.ne.s32.totalorder %s69, %s70
      %p82 = scmp.eq.s32.totalorder %s27, 3
      %p83 = por %p81, %p82
      %p85 = scmp.ne.s32.totalorder %s70, %s84
      %p86 = scmp.eq.s32.totalorder %s27, 0
      %p87 = por %p85, %p86
      %s89 = sadd.s32 %s88, 1
      %p92 = scmp.eq.s32.totalorder %s21, 3
      %p93 = scmp.ne.s32.totalorder %s88, %s90
      %p94 = scmp.eq.s32.totalorder %s21, 0
      %p95 = por %p93, %p94
      %p96 = scmp.ne.s32.totalorder %s88, %s90
      %p97 = scmp.eq.s32.totalorder %s26, 3
      %p98 = por %p96, %p97
      %p99 = scmp.ne.s32.totalorder %s90, %s91
      %p100 = scmp.eq.s32.totalorder %s26, 0
      %p101 = por %p99, %p100
      %p102 = scmp.ne.s32.totalorder %s90, %s91
      %p103 = scmp.eq.s32.totalorder %s27, 3
      %p104 = por %p102, %p103
      %p106 = scmp.ne.s32.totalorder %s91, %s105
      %p107 = scmp.eq.s32.totalorder %s27, 0
      %p108 = por %p106, %p107
      %s110 = sadd.s32 %s109, 1
      %p113 = scmp.eq.s32.totalorder %s21, 3
      %p114 = scmp.ne.s32.totalorder %s109, %s111
      %p115 = scmp.eq.s32.totalorder %s21, 0
      %p116 = por %p114, %p115
      %p117 = scmp.ne.s32.totalorder %s109, %s111
      %p118 = scmp.eq.s32.totalorder %s26, 3
      %p119 = por %p117, %p118
      %p120 = scmp.ne.s32.totalorder %s111, %s112
      %p121 = scmp.eq.s32.totalorder %s26, 0
      %p122 = por %p120, %p121
      %p123 = scmp.ne.s32.totalorder %s111, %s112
      %p124 = scmp.eq.s32.totalorder %s27, 3
      %p125 = por %p123, %p124
      %p127 = scmp.ne.s32.totalorder %s112, %s126
      %p128 = scmp.eq.s32.totalorder %s27, 0
      %p129 = por %p127, %p128
      %s131 = sadd.s32 %s130, 1
      %p134 = scmp.eq.s32.totalorder %s21, 3
      %p135 = scmp.ne.s32.totalorder %s130, %s132
      %p136 = scmp.eq.s32.totalorder %s21, 0
      %p137 = por %p135, %p136
      %p138 = scmp.ne.s32.totalorder %s130, %s132
      %p139 = scmp.eq.s32.totalorder %s26, 3
      %p140 = por %p138, %p139
      %p141 = scmp.ne.s32.totalorder %s132, %s133
      %p142 = scmp.eq.s32.totalorder %s26, 0
      %p143 = por %p141, %p142
      %p144 = scmp.ne.s32.totalorder %s132, %s133
      %p145 = scmp.eq.s32.totalorder %s27, 3
      %p146 = por %p144, %p145
      %p148 = scmp.ne.s32.totalorder %s133, %s147
      %p149 = scmp.eq.s32.totalorder %s27, 0
      %p150 = por %p148, %p149
      %s152 = sadd.s32 %s151, 1
      %p155 = scmp.eq.s32.totalorder %s21, 3
      %p156 = scmp.ne.s32.totalorder %s151, %s153
      %p157 = scmp.eq.s32.totalorder %s21, 0
      %p158 = por %p156, %p157
      %p159 = scmp.ne.s32.totalorder %s151, %s153
      %p160 = scmp.eq.s32.totalorder %s26, 3
      %p161 = por %p159, %p160
      %p162 = scmp.ne.s32.totalorder %s153, %s154
      %p163 = scmp.eq.s32.totalorder %s26, 0
      %p164 = por %p162, %p163
      %p165 = scmp.ne.s32.totalorder %s153, %s154
      %p166 = scmp.eq.s32.totalorder %s27, 3
      %p167 = por %p165, %p166
      %p169 = scmp.ne.s32.totalorder %s154, %s168
      %p170 = scmp.eq.s32.totalorder %s27, 0
      %p171 = por %p169, %p170
      %s173 = sadd.s32 %s172, 1
      %p176 = scmp.eq.s32.totalorder %s21, 3
      %p177 = scmp.ne.s32.totalorder %s172, %s174
      %p178 = scmp.eq.s32.totalorder %s21, 0
      %p179 = por %p177, %p178
      %p180 = scmp.ne.s32.totalorder %s172, %s174
      %p181 = scmp.eq.s32.totalorder %s26, 3
      %p182 = por %p180, %p181
      %p183 = scmp.ne.s32.totalorder %s174, %s175
      %p184 = scmp.eq.s32.totalorder %s26, 0
      %p185 = por %p183, %p184
      %p186 = scmp.ne.s32.totalorder %s174, %s175
      %p187 = scmp.eq.s32.totalorder %s27, 3
      %p188 = por %p186, %p187
      %p190 = scmp.ne.s32.totalorder %s175, %s189
      %p191 = scmp.eq.s32.totalorder %s27, 0
      %p192 = por %p190, %p191
      %s193 = ssub.s32 %s28, %s40
      %s194 = ssub.s32 %s29, %s36
      %s195 = sor.u32 %s193, %s194
      %p196 = scmp.eq.s32.totalorder %s195, 0
      %s198 = sadd.s32 %s197, 1
      %s199 = scalar_select %p196, %s197, %s198
      %p202 = pneg %p196
      %p203 = scmp.eq.s32.totalorder %s21, 3
      %p204 = por %p202, %p203
      %p205 = scmp.ne.s32.totalorder %s197, %s200
      %p206 = scmp.eq.s32.totalorder %s21, 0
      %p207 = por %p205, %p206
      %p208 = scmp.ne.s32.totalorder %s197, %s200
      %p209 = scmp.eq.s32.totalorder %s26, 3
      %p210 = por %p208, %p209
      %p211 = scmp.ne.s32.totalorder %s200, %s201
      %p212 = scmp.eq.s32.totalorder %s26, 0
      %p213 = por %p211, %p212
      %p214 = scmp.ne.s32.totalorder %s200, %s201
      %p215 = scmp.eq.s32.totalorder %s27, 3
      %p216 = por %p214, %p215
      %p218 = scmp.ne.s32.totalorder %s201, %s217
      %p219 = scmp.eq.s32.totalorder %s27, 0
      %p220 = por %p218, %p219
      %p221 = scmp.le.s32.totalorder 1, %s21
      %p222 = scmp.lt.s32.totalorder %s21, 5
      %p223 = pnand %p221, %p222
      %p224 = pneg %p223
      // Predicated region
      $region9: #{tpu_custom_call.1} parent=5 // pred_check
        _
      $region10: #{tpu_custom_call.1} parent=5 // pred_check_branch
        %226 = sbr.rel (%p223) target = $region12
      $region11: #{tpu_custom_call.1} parent=5 // pred_region
        %s227 = ssub.s32 %s21, 1
        // Predicated region
        $region13: #{tpu_custom_call.1} parent=11 // pred_check
          %p228 = pneg %p80
        $region14: #{tpu_custom_call.1} parent=11 // pred_check_branch
          %230 = sbr.rel (%p228) target = $region16
        $region15: #{tpu_custom_call.1} parent=11 // pred_region
          %s232 = ssub.s32 512, 512
          %233 = vsyncadd [#allocation8], %s232
          %s234 = sshll.u32 [#allocation7], 4
          %s235 = int_to_ptr.vmem [resolvable:$true] %s234
          %240 = dma.hbm_to_vmem [thread:$0]  %s1, 512, %s235, [#allocation8], 128, 128, 8
        $region16: #{tpu_custom_call.1} parent=11 // pred_fallthru
          _
        // Predicated region
        $region17: #{tpu_custom_call.1} parent=11 // pred_check
          %p241 = pneg %p101
        $region18: #{tpu_custom_call.1} parent=11 // pred_check_branch
          %243 = sbr.rel (%p241) target = $region20
        $region19: #{tpu_custom_call.1} parent=11 // pred_region
          _
        $region20: #{tpu_custom_call.1} parent=11 // pred_fallthru
          _
        // Predicated region
        $region21: #{tpu_custom_call.1} parent=11 // pred_check
          %p244 = pneg %p122
        $region22: #{tpu_custom_call.1} parent=11 // pred_check_branch
          %246 = sbr.rel (%p244) target = $region24
        $region23: #{tpu_custom_call.1} parent=11 // pred_region
          %s248 = ssub.s32 512, 512
          %249 = vsyncadd [#allocation8], %s248
          %s250 = sshll.u32 [#allocation9], 4
          %s251 = int_to_ptr.vmem [resolvable:$true] %s250
          %256 = dma.hbm_to_vmem [thread:$0]  %s3, 512, %s251, [#allocation8], 128, 128, 8
        $region24: #{tpu_custom_call.1} parent=11 // pred_fallthru
          _
        // Predicated region
        $region25: #{tpu_custom_call.1} parent=11 // pred_check
          %p257 = pneg %p143
        $region26: #{tpu_custom_call.1} parent=11 // pred_check_branch
          %259 = sbr.rel (%p257) target = $region28
        $region27: #{tpu_custom_call.1} parent=11 // pred_region
          _
        $region28: #{tpu_custom_call.1} parent=11 // pred_fallthru
          _
        // Predicated region
        $region29: #{tpu_custom_call.1} parent=11 // pred_check
          %p260 = pneg %p164
        $region30: #{tpu_custom_call.1} parent=11 // pred_check_branch
          %262 = sbr.rel (%p260) target = $region32
        $region31: #{tpu_custom_call.1} parent=11 // pred_region
          %s264 = ssub.s32 512, 512
          %265 = vsyncadd [#allocation11], %s264
          %s266 = sshll.u32 [#allocation10], 4
          %s267 = int_to_ptr.vmem [resolvable:$true] %s266
          %272 = dma.hbm_to_vmem [thread:$0]  %s5, 512, %s267, [#allocation11], 128, 128, 8
        $region32: #{tpu_custom_call.1} parent=11 // pred_fallthru
          _
        // Predicated region
        $region33: #{tpu_custom_call.1} parent=11 // pred_check
          %p273 = pneg %p185
        $region34: #{tpu_custom_call.1} parent=11 // pred_check_branch
          %275 = sbr.rel (%p273) target = $region36
        $region35: #{tpu_custom_call.1} parent=11 // pred_region
          _
        $region36: #{tpu_custom_call.1} parent=11 // pred_fallthru
          _
      $region12: #{tpu_custom_call.1} parent=5 // pred_fallthru
        _
      %p276 = scmp.lt.s32.totalorder %s21, 4
      // Predicated region
      $region37: #{tpu_custom_call.1} parent=5 // pred_check
        %p277 = pneg %p276
      $region38: #{tpu_custom_call.1} parent=5 // pred_check_branch
        %279 = sbr.rel (%p277) target = $region40
      $region39: #{tpu_custom_call.1} parent=5 // pred_region
        // Predicated region
        $region41: #{tpu_custom_call.1} parent=39 // pred_check
          %p280 = pneg %p53
        $region42: #{tpu_custom_call.1} parent=39 // pred_check_branch
          %282 = sbr.rel (%p280) target = $region44
        $region43: #{tpu_custom_call.1} parent=39 // pred_region
          %s283 = sand.u32 %s43, 1
          %s284 = scalar_lea.sflag [#allocation5], %s283
          %s285 = sand.u32 %s43, 1
          %s286 = smul.addr %s285, 16
          %s287 = scalar_lea.vmem [#allocation4], %s286
          %s289 = ssub.s32 256, 256
          %290 = vsyncadd %s284, %s289
          %s291 = smul.addr %s28, 2
          %s292 = smul.addr %s291, 128
          %s293 = scalar_lea.hbm %s0, %s292
          %s294 = sshll.u32 %s287, 4
          %s295 = int_to_ptr.vmem [resolvable:$true] %s294
          %300 = dma.hbm_to_vmem [thread:$0]  %s293, 256, %s295, %s284, 128, 128, 8
        $region44: #{tpu_custom_call.1} parent=39 // pred_fallthru
          _
      $region40: #{tpu_custom_call.1} parent=5 // pred_fallthru
        _
      %p301 = scmp.le.s32.totalorder 1, %s21
      %p302 = scmp.lt.s32.totalorder %s21, 5
      %p303 = pnand %p301, %p302
      %p304 = pneg %p303
      // Predicated region
      $region45: #{tpu_custom_call.1} parent=5 // pred_check
        _
      $region46: #{tpu_custom_call.1} parent=5 // pred_check_branch
        %306 = sbr.rel (%p303) target = $region48
      $region47: #{tpu_custom_call.1} parent=5 // pred_region
        %s307 = ssub.s32 %s21, 1
        %s308 = sand.u32 %s46, 1
        %s309 = scalar_lea.sflag [#allocation5], %s308
        %s310 = sand.u32 %s46, 1
        %s311 = smul.addr %s310, 16
        %s312 = scalar_lea.vmem [#allocation4], %s311
        // Predicated region
        $region49: #{tpu_custom_call.1} parent=47 // pred_check
          %p313 = pneg %p59
        $region50: #{tpu_custom_call.1} parent=47 // pred_check_branch
          %315 = sbr.rel (%p313) target = $region52
        $region51: #{tpu_custom_call.1} parent=47 // pred_region
          %316 = dma.done %s309, 256
        $region52: #{tpu_custom_call.1} parent=47 // pred_fallthru
          _
        // Predicated region
        $region53: #{tpu_custom_call.1} parent=47 // pred_check
          %p317 = pneg %p80
        $region54: #{tpu_custom_call.1} parent=47 // pred_check_branch
          %319 = sbr.rel (%p317) target = $region56
        $region55: #{tpu_custom_call.1} parent=47 // pred_region
          %320 = dma.done [#allocation8], 512
        $region56: #{tpu_custom_call.1} parent=47 // pred_fallthru
          _
        // Predicated region
        $region57: #{tpu_custom_call.1} parent=47 // pred_check
          %p321 = pneg %p122
        $region58: #{tpu_custom_call.1} parent=47 // pred_check_branch
          %323 = sbr.rel (%p321) target = $region60
        $region59: #{tpu_custom_call.1} parent=47 // pred_region
          %324 = dma.done [#allocation8], 512
        $region60: #{tpu_custom_call.1} parent=47 // pred_fallthru
          _
        // Predicated region
        $region61: #{tpu_custom_call.1} parent=47 // pred_check
          %p325 = pneg %p164
        $region62: #{tpu_custom_call.1} parent=47 // pred_check_branch
          %327 = sbr.rel (%p325) target = $region64
        $region63: #{tpu_custom_call.1} parent=47 // pred_region
          %328 = dma.done [#allocation11], 512
        $region64: #{tpu_custom_call.1} parent=47 // pred_fallthru
          _
        %s329 = sand.u32 %s46, 1
        %s330 = scalar_lea.sflag [#allocation5], %s329
        %s331 = sand.u32 %s46, 1
        %s332 = smul.addr %s331, 16
        %s333 = scalar_lea.vmem [#allocation4], %s332
        %p334 = pneg %p59
        %p335 = pneg %p56
        %p336 = pneg %p80
        %p337 = pneg %p77
        %p338 = pneg %p101
        %p339 = pneg %p98
        %p340 = pneg %p122
        %p341 = pneg %p119
        %p342 = pneg %p143
        %p343 = pneg %p140
        %p344 = pneg %p164
        %p345 = pneg %p161
        %p346 = pneg %p185
        %p347 = pneg %p182
        %p348 = pneg %p213
        %p349 = pneg %p210
        %s350 = sand.u32 %s200, 1
        %s351 = scalar_lea.sflag [#allocation6], %s350
        %s352 = sand.u32 %s200, 1
        %s353 = smul.addr %s352, 8
        %s354 = scalar_lea.vmem [#allocation12], %s353
        %p355 = scmp.eq.s32.totalorder %s31, 0
        // Predicated region
        $region65: #{tpu_custom_call.1} parent=47 // pred_check
          %p356 = pneg %p355
        $region66: #{tpu_custom_call.1} parent=47 // pred_check_branch
          %358 = sbr.rel (%p356) target = $region68
        $region67: #{tpu_custom_call.1} parent=47 // pred_region
          %v359 = vld [vmem:[%s312] sm:$0xff]
          %v360 = vld [vmem:[%s312 + $0x8] sm:$0xff]
          %v361 = vld [vmem:[#allocation9] sm:$0xff]
          %v362 = vld [vmem:[#allocation9 + $0x8] sm:$0xff]
          %v363 = vld [vmem:[#allocation9 + $0x10] sm:$0xff]
          %v364 = vld [vmem:[#allocation9 + $0x18] sm:$0xff]
          %v365 = vld [vmem:[%s4] sm:$0x1]
          %v367 = vlaneseq
          %v368 = vshrl.u32 %v367, 7
          %v369 = vsub.s32 0, %v368
          %v370 = vrot.slane %v365, %v369
          %vm372 = vcmask 261120
          %v374 = vsel %vm372, %v359, 0
          %v377 = vsel %vm372, %v360, 0
          %379 = vmatprep.subr.mxu0 0.0
          %380 = vmatpush1.msra.mxu0 0.0
          %381 = vmatprep.subr.mxu0 0.0
          %382 = vmatpush1.msra.mxu0 0.0
          %383 = vmatprep.subr.mxu0 0.0
          %384 = vmatpush1.msra.mxu0 0.0
          %385 = vmatprep.subr.mxu0 0.0
          %386 = vmatpush1.msra.mxu0 0.0
          %387 = vmatprep.subr.mxu0 0.0
          %388 = vmatpush1.msra.mxu0 0.0
          %389 = vmatprep.subr.mxu0 0.0
          %390 = vmatpush1.msra.mxu0 0.0
          %391 = vmatprep.subr.mxu0 0.0
          %392 = vmatpush1.msra.mxu0 0.0
          %393 = vmatprep.subr.mxu0 0.0
          %394 = vmatpush1.msra.mxu0 0.0
          %395 = vmatprep.subr.mxu0 0.0
          %396 = vmatpush1.msra.mxu0 0.0
          %397 = vmatprep.subr.mxu0 0.0
          %398 = vmatpush1.msra.mxu0 0.0
          %399 = vmatprep.subr.mxu0 0.0
          %400 = vmatpush1.msra.mxu0 0.0
          %401 = vmatprep.subr.mxu0 0.0
          %402 = vmatpush1.msra.mxu0 0.0
          %403 = vmatprep.subr.mxu0 0.0
          %404 = vmatpush1.msra.mxu0 %v364
          %405 = vmatprep.subr.mxu0 0.0
          %406 = vmatpush1.msra.mxu0 %v363
          %407 = vmatprep.subr.mxu0 0.0
          %408 = vmatpush1.msra.mxu0 %v362
          %409 = vmatprep.subr.mxu0 0.0
          %410 = vmatpush1.msra.mxu0 %v361
          %411 = vmatprep.subr.mxu0 0.0
          %412 = vmatpush2.msra.mxu0 0.0
          %413 = vmatprep.subr.mxu0 0.0
          %414 = vmatpush2.msra.mxu0 0.0
          %415 = vmatprep.subr.mxu0 0.0
          %416 = vmatpush2.msra.mxu0 0.0
          %417 = vmatprep.subr.mxu0 0.0
          %418 = vmatpush2.msra.mxu0 0.0
          %419 = vmatprep.subr.mxu0 0.0
          %420 = vmatpush2.msra.mxu0 0.0
          %421 = vmatprep.subr.mxu0 0.0
          %422 = vmatpush2.msra.mxu0 0.0
          %423 = vmatprep.subr.mxu0 0.0
          %424 = vmatpush2.msra.mxu0 0.0
          %425 = vmatprep.subr.mxu0 0.0
          %426 = vmatpush2.msra.mxu0 0.0
          %427 = vmatprep.subr.mxu0 0.0
          %428 = vmatpush2.msra.mxu0 0.0
          %429 = vmatprep.subr.mxu0 0.0
          %430 = vmatpush2.msra.mxu0 0.0
          %431 = vmatprep.subr.mxu0 0.0
          %432 = vmatpush2.msra.mxu0 0.0
          %433 = vmatprep.subr.mxu0 0.0
          %434 = vmatpush2.msra.mxu0 0.0
          %435 = vmatprep.subr.mxu0 0.0
          %436 = vmatpush2.msra.mxu0 0.0
          %437 = vmatprep.subr.mxu0 0.0
          %438 = vmatpush2.msra.mxu0 0.0
          %439 = vmatprep.subr.mxu0 0.0
          %440 = vmatpush2.msra.mxu0 0.0
          %441 = vmatprep.subr.mxu0 0.0
          %442 = vmatpush2.msra.mxu0 0.0
          %443 = vmatprep.mubr.f32.mxu0 0.0
          %444 = vmatmul.mubr.f32.gmra.mxu0 %v374
          %v445 = vpop.f32.mrf.mxu0
          %v446 = vadd.f32 %v370, %v445
          %v447 = vpop.f32.mrf.mxu0
          %448 = vmatprep.mubr.f32.mxu0 0.0
          %449 = vmatmul.mubr.f32.gmra.mxu0 %v377
          %v450 = vpop.f32.mrf.mxu0
          %v451 = vadd.f32 %v370, %v450
          %v452 = vpop.f32.mrf.mxu0
          %453 = vdwg.mxu0
          %vm454 = vcmask 523264
          %455 = vst.msk [vmem:[#allocation2] sm:$0xff] %vm454, %v446
          %456 = vst.msk [vmem:[#allocation2 + $0x8] sm:$0xff] %vm454, %v451
        $region68: #{tpu_custom_call.1} parent=47 // pred_fallthru
          _
        %s457 = smul.u32 %s31, 8
        %s458 = scalar_lea.vmem %s312, %s457 [#allocation4]
        %v459 = vld [vmem:[%s458] sm:$0xff]
        %v460 = vld [vmem:[#allocation7] sm:$0xff]
        %v461 = vld [vmem:[#allocation7 + $0x8] sm:$0xff]
        %v462 = vld [vmem:[#allocation7 + $0x10] sm:$0xff]
        %v463 = vld [vmem:[#allocation7 + $0x18] sm:$0xff]
        %v464 = vld [vmem:[%s2] sm:$0x1]
        %v466 = vlaneseq
        %v467 = vshrl.u32 %v466, 7
        %v468 = vsub.s32 0, %v467
        %v469 = vrot.slane %v464, %v468
        %vm471 = vcmask 261120
        %v473 = vsel %vm471, %v459, 0
        %475 = vmatprep.subr.mxu0 0.0
        %476 = vmatpush1.msra.mxu0 0.0
        %477 = vmatprep.subr.mxu0 0.0
        %478 = vmatpush1.msra.mxu0 0.0
        %479 = vmatprep.subr.mxu0 0.0
        %480 = vmatpush1.msra.mxu0 0.0
        %481 = vmatprep.subr.mxu0 0.0
        %482 = vmatpush1.msra.mxu0 0.0
        %483 = vmatprep.subr.mxu0 0.0
        %484 = vmatpush1.msra.mxu0 0.0
        %485 = vmatprep.subr.mxu0 0.0
        %486 = vmatpush1.msra.mxu0 0.0
        %487 = vmatprep.subr.mxu0 0.0
        %488 = vmatpush1.msra.mxu0 0.0
        %489 = vmatprep.subr.mxu0 0.0
        %490 = vmatpush1.msra.mxu0 0.0
        %491 = vmatprep.subr.mxu0 0.0
        %492 = vmatpush1.msra.mxu0 0.0
        %493 = vmatprep.subr.mxu0 0.0
        %494 = vmatpush1.msra.mxu0 0.0
        %495 = vmatprep.subr.mxu0 0.0
        %496 = vmatpush1.msra.mxu0 0.0
        %497 = vmatprep.subr.mxu0 0.0
        %498 = vmatpush1.msra.mxu0 0.0
        %499 = vmatprep.subr.mxu0 0.0
        %500 = vmatpush1.msra.mxu0 %v463
        %501 = vmatprep.subr.mxu0 0.0
        %502 = vmatpush1.msra.mxu0 %v462
        %503 = vmatprep.subr.mxu0 0.0
        %504 = vmatpush1.msra.mxu0 %v461
        %505 = vmatprep.subr.mxu0 0.0
        %506 = vmatpush1.msra.mxu0 %v460
        %507 = vmatprep.subr.mxu0 0.0
        %508 = vmatpush2.msra.mxu0 0.0
        %509 = vmatprep.subr.mxu0 0.0
        %510 = vmatpush2.msra.mxu0 0.0
        %511 = vmatprep.subr.mxu0 0.0
        %512 = vmatpush2.msra.mxu0 0.0
        %513 = vmatprep.subr.mxu0 0.0
        %514 = vmatpush2.msra.mxu0 0.0
        %515 = vmatprep.subr.mxu0 0.0
        %516 = vmatpush2.msra.mxu0 0.0
        %517 = vmatprep.subr.mxu0 0.0
        %518 = vmatpush2.msra.mxu0 0.0
        %519 = vmatprep.subr.mxu0 0.0
        %520 = vmatpush2.msra.mxu0 0.0
        %521 = vmatprep.subr.mxu0 0.0
        %522 = vmatpush2.msra.mxu0 0.0
        %523 = vmatprep.subr.mxu0 0.0
        %524 = vmatpush2.msra.mxu0 0.0
        %525 = vmatprep.subr.mxu0 0.0
        %526 = vmatpush2.msra.mxu0 0.0
        %527 = vmatprep.subr.mxu0 0.0
        %528 = vmatpush2.msra.mxu0 0.0
        %529 = vmatprep.subr.mxu0 0.0
        %530 = vmatpush2.msra.mxu0 0.0
        %531 = vmatprep.subr.mxu0 0.0
        %532 = vmatpush2.msra.mxu0 0.0
        %533 = vmatprep.subr.mxu0 0.0
        %534 = vmatpush2.msra.mxu0 0.0
        %535 = vmatprep.subr.mxu0 0.0
        %536 = vmatpush2.msra.mxu0 0.0
        %537 = vmatprep.subr.mxu0 0.0
        %538 = vmatpush2.msra.mxu0 0.0
        %539 = vmatprep.mubr.f32.mxu0 0.0
        %540 = vmatmul.mubr.f32.gmra.mxu0 %v473
        %v541 = vpop.f32.mrf.mxu0
        %v542 = vadd.f32 %v469, %v541
        %v543 = vpop.f32.mrf.mxu0
        %544 = vdwg.mxu0
        loop: start=0, step=1, limit=2
        $region69: #{tpu_custom_call.1} parent=47 // loop_pre_header
          _
        $region70: #{tpu_custom_call.1} parent=47 // loop_header
          %s546 = sphi 0, %s550
          %p547 = scmp.ge.s32.totalorder %s546, 2
          %v551 = vphi -inf, %v637
          %v552 = vphi 0.0, %v648
          %v553 = vphi 0.0, %v726
        $region71: #{tpu_custom_call.1} parent=47 // loop_header_branch
          %549 = sbr.rel (%p547) target = $region75
        $region72: #{tpu_custom_call.1} parent=47 // loop_body
          %s554 = smul.u32 %s546, 8
          %s555 = scalar_lea.vmem [#allocation2], %s554
          %v556 = vld [vmem:[%s555] sm:$0xff]
          %vm557 = vcmask 64512
          %v559 = vsel %vm557, %v542, 0
          %v562 = vsel %vm557, %v556, 0
          %564 = vmatprep.subr.mxu0 0.0
          %565 = vmatpush1.xpose.msra.mxu0 0.0
          %566 = vmatprep.subr.mxu0 0.0
          %567 = vmatpush1.xpose.msra.mxu0 0.0
          %568 = vmatprep.subr.mxu0 0.0
          %569 = vmatpush1.xpose.msra.mxu0 0.0
          %570 = vmatprep.subr.mxu0 0.0
          %571 = vmatpush1.xpose.msra.mxu0 0.0
          %572 = vmatprep.subr.mxu0 0.0
          %573 = vmatpush1.xpose.msra.mxu0 0.0
          %574 = vmatprep.subr.mxu0 0.0
          %575 = vmatpush1.xpose.msra.mxu0 0.0
          %576 = vmatprep.subr.mxu0 0.0
          %577 = vmatpush1.xpose.msra.mxu0 0.0
          %578 = vmatprep.subr.mxu0 0.0
          %579 = vmatpush1.xpose.msra.mxu0 0.0
          %580 = vmatprep.subr.mxu0 0.0
          %581 = vmatpush1.xpose.msra.mxu0 0.0
          %582 = vmatprep.subr.mxu0 0.0
          %583 = vmatpush1.xpose.msra.mxu0 0.0
          %584 = vmatprep.subr.mxu0 0.0
          %585 = vmatpush1.xpose.msra.mxu0 0.0
          %586 = vmatprep.subr.mxu0 0.0
          %587 = vmatpush1.xpose.msra.mxu0 0.0
          %588 = vmatprep.subr.mxu0 0.0
          %589 = vmatpush1.xpose.msra.mxu0 0.0
          %590 = vmatprep.subr.mxu0 0.0
          %591 = vmatpush1.xpose.msra.mxu0 0.0
          %592 = vmatprep.subr.mxu0 0.0
          %593 = vmatpush1.xpose.msra.mxu0 0.0
          %594 = vmatprep.subr.mxu0 0.0
          %595 = vmatpush1.xpose.msra.mxu0 %v562
          %596 = vmatprep.subr.mxu0 0.0
          %597 = vmatpush2.xpose.msra.mxu0 0.0
          %598 = vmatprep.subr.mxu0 0.0
          %599 = vmatpush2.xpose.msra.mxu0 0.0
          %600 = vmatprep.subr.mxu0 0.0
          %601 = vmatpush2.xpose.msra.mxu0 0.0
          %602 = vmatprep.subr.mxu0 0.0
          %603 = vmatpush2.xpose.msra.mxu0 0.0
          %604 = vmatprep.subr.mxu0 0.0
          %605 = vmatpush2.xpose.msra.mxu0 0.0
          %606 = vmatprep.subr.mxu0 0.0
          %607 = vmatpush2.xpose.msra.mxu0 0.0
          %608 = vmatprep.subr.mxu0 0.0
          %609 = vmatpush2.xpose.msra.mxu0 0.0
          %610 = vmatprep.subr.mxu0 0.0
          %611 = vmatpush2.xpose.msra.mxu0 0.0
          %612 = vmatprep.subr.mxu0 0.0
          %613 = vmatpush2.xpose.msra.mxu0 0.0
          %614 = vmatprep.subr.mxu0 0.0
          %615 = vmatpush2.xpose.msra.mxu0 0.0
          %616 = vmatprep.subr.mxu0 0.0
          %617 = vmatpush2.xpose.msra.mxu0 0.0
          %618 = vmatprep.subr.mxu0 0.0
          %619 = vmatpush2.xpose.msra.mxu0 0.0
          %620 = vmatprep.subr.mxu0 0.0
          %621 = vmatpush2.xpose.msra.mxu0 0.0
          %622 = vmatprep.subr.mxu0 0.0
          %623 = vmatpush2.xpose.msra.mxu0 0.0
          %624 = vmatprep.subr.mxu0 0.0
          %625 = vmatpush2.xpose.msra.mxu0 0.0
          %626 = vmatprep.subr.mxu0 0.0
          %627 = vmatpush2.xpose.msra.mxu0 0.0
          %628 = vmatprep.mubr.f32.mxu0 0.0
          %629 = vmatmul.mubr.f32.gmra.mxu0 %v559
          %v630 = vpop.f32.mrf.mxu0
          %v631 = vadd.f32 0.0, %v630
          %v632 = vpop.f32.mrf.mxu0
          %633 = vdwg.mxu0
          %v634 = vsel %vm557, %v631, -inf
          %635 = vmax.xlane.f32.xlu0 %v634
          %v636 = vpop.xlane.xlu0 %635
          %v637 = vmax.f32 %v551, %v636
          %v638 = vsub.f32 %v551, %v637
          %v639 = vmul.f32 %v638, 1.442695
          %v640 = vpow.pop %v639
          %v641 = vsub.f32 %v631, %v637
          %v642 = vmul.f32 %v641, 1.442695
          %v643 = vpow.pop %v642
          %v644 = vmul.f32 %v640, %v552
          %v645 = vsel %vm557, %v643, 0.0
          %646 = vadd.xlane.f32.xlu0 %v645
          %v647 = vpop.xlane.xlu0 %646
          %v648 = vadd.f32 %v644, %v647
          %v649 = vmul.f32 %v640, %v553
          %650 = vrot.lane.b32.xlu0 %v556, 96
          %v651 = vpop.permute.xlu0 %650
          %v654 = vsel %vm557, %v643, 0
          %656 = vmatprep.subr.mxu0 0.0
          %657 = vmatpush1.msra.mxu0 0.0
          %658 = vmatprep.subr.mxu0 0.0
          %659 = vmatpush1.msra.mxu0 0.0
          %660 = vmatprep.subr.mxu0 0.0
          %661 = vmatpush1.msra.mxu0 0.0
          %662 = vmatprep.subr.mxu0 0.0
          %663 = vmatpush1.msra.mxu0 0.0
          %664 = vmatprep.subr.mxu0 0.0
          %665 = vmatpush1.msra.mxu0 0.0
          %666 = vmatprep.subr.mxu0 0.0
          %667 = vmatpush1.msra.mxu0 0.0
          %668 = vmatprep.subr.mxu0 0.0
          %669 = vmatpush1.msra.mxu0 0.0
          %670 = vmatprep.subr.mxu0 0.0
          %671 = vmatpush1.msra.mxu0 0.0
          %672 = vmatprep.subr.mxu0 0.0
          %673 = vmatpush1.msra.mxu0 0.0
          %674 = vmatprep.subr.mxu0 0.0
          %675 = vmatpush1.msra.mxu0 0.0
          %676 = vmatprep.subr.mxu0 0.0
          %677 = vmatpush1.msra.mxu0 0.0
          %678 = vmatprep.subr.mxu0 0.0
          %679 = vmatpush1.msra.mxu0 0.0
          %680 = vmatprep.subr.mxu0 0.0
          %681 = vmatpush1.msra.mxu0 0.0
          %682 = vmatprep.subr.mxu0 0.0
          %683 = vmatpush1.msra.mxu0 0.0
          %684 = vmatprep.subr.mxu0 0.0
          %685 = vmatpush1.msra.mxu0 0.0
          %686 = vmatprep.subr.mxu0 0.0
          %687 = vmatpush1.msra.mxu0 %v651
          %688 = vmatprep.subr.mxu0 0.0
          %689 = vmatpush2.msra.mxu0 0.0
          %690 = vmatprep.subr.mxu0 0.0
          %691 = vmatpush2.msra.mxu0 0.0
          %692 = vmatprep.subr.mxu0 0.0
          %693 = vmatpush2.msra.mxu0 0.0
          %694 = vmatprep.subr.mxu0 0.0
          %695 = vmatpush2.msra.mxu0 0.0
          %696 = vmatprep.subr.mxu0 0.0
          %697 = vmatpush2.msra.mxu0 0.0
          %698 = vmatprep.subr.mxu0 0.0
          %699 = vmatpush2.msra.mxu0 0.0
          %700 = vmatprep.subr.mxu0 0.0
          %701 = vmatpush2.msra.mxu0 0.0
          %702 = vmatprep.subr.mxu0 0.0
          %703 = vmatpush2.msra.mxu0 0.0
          %704 = vmatprep.subr.mxu0 0.0
          %705 = vmatpush2.msra.mxu0 0.0
          %706 = vmatprep.subr.mxu0 0.0
          %707 = vmatpush2.msra.mxu0 0.0
          %708 = vmatprep.subr.mxu0 0.0
          %709 = vmatpush2.msra.mxu0 0.0
          %710 = vmatprep.subr.mxu0 0.0
          %711 = vmatpush2.msra.mxu0 0.0
          %712 = vmatprep.subr.mxu0 0.0
          %713 = vmatpush2.msra.mxu0 0.0
          %714 = vmatprep.subr.mxu0 0.0
          %715 = vmatpush2.msra.mxu0 0.0
          %716 = vmatprep.subr.mxu0 0.0
          %717 = vmatpush2.msra.mxu0 0.0
          %718 = vmatprep.subr.mxu0 0.0
          %719 = vmatpush2.msra.mxu0 0.0
          %720 = vmatprep.mubr.f32.mxu0 0.0
          %721 = vmatmul.mubr.f32.gmra.mxu0 %v654
          %v722 = vpop.f32.mrf.mxu0
          %v723 = vadd.f32 0.0, %v722
          %v724 = vpop.f32.mrf.mxu0
          %725 = vdwg.mxu0
          %v726 = vadd.f32 %v649, %v723
        $region73: #{tpu_custom_call.1} parent=47 // loop_footer
          %s550 = sadd.s32 1, %s546
        $region74: #{tpu_custom_call.1} parent=47 // loop_footer_branch
          %545 = sbr.rel target = $region70
        $region75: #{tpu_custom_call.1} parent=47 // loop_exit
          _
        %v727 = vrcp.pop %v552
        %v728 = vmul.f32 1.0, %v727
        %v729 = vmul.f32 %v553, %v728
        %vm730 = vcmask 64512
        %731 = vst.msk [vmem:[#allocation3] sm:$0xff] %vm730, %v729
        loop: start=0, step=1, limit=2
        $region76: #{tpu_custom_call.1} parent=47 // loop_pre_header
          _
        $region77: #{tpu_custom_call.1} parent=47 // loop_header
          %s733 = sphi 0, %s737
          %p734 = scmp.ge.s32.totalorder %s733, 2
          %v738 = vphi -inf, %v827
          %v739 = vphi 0.0, %v838
          %v740 = vphi 0.0, %v916
        $region78: #{tpu_custom_call.1} parent=47 // loop_header_branch
          %736 = sbr.rel (%p734) target = $region82
        $region79: #{tpu_custom_call.1} parent=47 // loop_body
          %s741 = smul.u32 %s733, 8
          %s742 = scalar_lea.vmem [#allocation2], %s741
          %v743 = vld [vmem:[%s742] sm:$0xff]
          %745 = vrot.lane.b32.xlu0 %v542, 120
          %v746 = vpop.permute.xlu0 %745
          %748 = vrot.lane.b32.xlu0 %v743, 120
          %v749 = vpop.permute.xlu0 %748
          %v750 = vsel %vm730, %v746, 0
          %v752 = vsel %vm730, %v749, 0
          %754 = vmatprep.subr.mxu0 0.0
          %755 = vmatpush1.xpose.msra.mxu0 0.0
          %756 = vmatprep.subr.mxu0 0.0
          %757 = vmatpush1.xpose.msra.mxu0 0.0
          %758 = vmatprep.subr.mxu0 0.0
          %759 = vmatpush1.xpose.msra.mxu0 0.0
          %760 = vmatprep.subr.mxu0 0.0
          %761 = vmatpush1.xpose.msra.mxu0 0.0
          %762 = vmatprep.subr.mxu0 0.0
          %763 = vmatpush1.xpose.msra.mxu0 0.0
          %764 = vmatprep.subr.mxu0 0.0
          %765 = vmatpush1.xpose.msra.mxu0 0.0
          %766 = vmatprep.subr.mxu0 0.0
          %767 = vmatpush1.xpose.msra.mxu0 0.0
          %768 = vmatprep.subr.mxu0 0.0
          %769 = vmatpush1.xpose.msra.mxu0 0.0
          %770 = vmatprep.subr.mxu0 0.0
          %771 = vmatpush1.xpose.msra.mxu0 0.0
          %772 = vmatprep.subr.mxu0 0.0
          %773 = vmatpush1.xpose.msra.mxu0 0.0
          %774 = vmatprep.subr.mxu0 0.0
          %775 = vmatpush1.xpose.msra.mxu0 0.0
          %776 = vmatprep.subr.mxu0 0.0
          %777 = vmatpush1.xpose.msra.mxu0 0.0
          %778 = vmatprep.subr.mxu0 0.0
          %779 = vmatpush1.xpose.msra.mxu0 0.0
          %780 = vmatprep.subr.mxu0 0.0
          %781 = vmatpush1.xpose.msra.mxu0 0.0
          %782 = vmatprep.subr.mxu0 0.0
          %783 = vmatpush1.xpose.msra.mxu0 0.0
          %784 = vmatprep.subr.mxu0 0.0
          %785 = vmatpush1.xpose.msra.mxu0 %v752
          %786 = vmatprep.subr.mxu0 0.0
          %787 = vmatpush2.xpose.msra.mxu0 0.0
          %788 = vmatprep.subr.mxu0 0.0
          %789 = vmatpush2.xpose.msra.mxu0 0.0
          %790 = vmatprep.subr.mxu0 0.0
          %791 = vmatpush2.xpose.msra.mxu0 0.0
          %792 = vmatprep.subr.mxu0 0.0
          %793 = vmatpush2.xpose.msra.mxu0 0.0
          %794 = vmatprep.subr.mxu0 0.0
          %795 = vmatpush2.xpose.msra.mxu0 0.0
          %796 = vmatprep.subr.mxu0 0.0
          %797 = vmatpush2.xpose.msra.mxu0 0.0
          %798 = vmatprep.subr.mxu0 0.0
          %799 = vmatpush2.xpose.msra.mxu0 0.0
          %800 = vmatprep.subr.mxu0 0.0
          %801 = vmatpush2.xpose.msra.mxu0 0.0
          %802 = vmatprep.subr.mxu0 0.0
          %803 = vmatpush2.xpose.msra.mxu0 0.0
          %804 = vmatprep.subr.mxu0 0.0
          %805 = vmatpush2.xpose.msra.mxu0 0.0
          %806 = vmatprep.subr.mxu0 0.0
          %807 = vmatpush2.xpose.msra.mxu0 0.0
          %808 = vmatprep.subr.mxu0 0.0
          %809 = vmatpush2.xpose.msra.mxu0 0.0
          %810 = vmatprep.subr.mxu0 0.0
          %811 = vmatpush2.xpose.msra.mxu0 0.0
          %812 = vmatprep.subr.mxu0 0.0
          %813 = vmatpush2.xpose.msra.mxu0 0.0
          %814 = vmatprep.subr.mxu0 0.0
          %815 = vmatpush2.xpose.msra.mxu0 0.0
          %816 = vmatprep.subr.mxu0 0.0
          %817 = vmatpush2.xpose.msra.mxu0 0.0
          %818 = vmatprep.mubr.f32.mxu0 0.0
          %819 = vmatmul.mubr.f32.gmra.mxu0 %v750
          %v820 = vpop.f32.mrf.mxu0
          %v821 = vadd.f32 0.0, %v820
          %v822 = vpop.f32.mrf.mxu0
          %823 = vdwg.mxu0
          %v824 = vsel %vm730, %v821, -inf
          %825 = vmax.xlane.f32.xlu0 %v824
          %v826 = vpop.xlane.xlu0 %825
          %v827 = vmax.f32 %v738, %v826
          %v828 = vsub.f32 %v738, %v827
          %v829 = vmul.f32 %v828, 1.442695
          %v830 = vpow.pop %v829
          %v831 = vsub.f32 %v821, %v827
          %v832 = vmul.f32 %v831, 1.442695
          %v833 = vpow.pop %v832
          %v834 = vmul.f32 %v830, %v739
          %v835 = vsel %vm730, %v833, 0.0
          %836 = vadd.xlane.f32.xlu0 %v835
          %v837 = vpop.xlane.xlu0 %836
          %v838 = vadd.f32 %v834, %v837
          %v839 = vmul.f32 %v830, %v740
          %840 = vrot.lane.b32.xlu0 %v743, 88
          %v841 = vpop.permute.xlu0 %840
          %v844 = vsel %vm730, %v833, 0
          %846 = vmatprep.subr.mxu0 0.0
          %847 = vmatpush1.msra.mxu0 0.0
          %848 = vmatprep.subr.mxu0 0.0
          %849 = vmatpush1.msra.mxu0 0.0
          %850 = vmatprep.subr.mxu0 0.0
          %851 = vmatpush1.msra.mxu0 0.0
          %852 = vmatprep.subr.mxu0 0.0
          %853 = vmatpush1.msra.mxu0 0.0
          %854 = vmatprep.subr.mxu0 0.0
          %855 = vmatpush1.msra.mxu0 0.0
          %856 = vmatprep.subr.mxu0 0.0
          %857 = vmatpush1.msra.mxu0 0.0
          %858 = vmatprep.subr.mxu0 0.0
          %859 = vmatpush1.msra.mxu0 0.0
          %860 = vmatprep.subr.mxu0 0.0
          %861 = vmatpush1.msra.mxu0 0.0
          %862 = vmatprep.subr.mxu0 0.0
          %863 = vmatpush1.msra.mxu0 0.0
          %864 = vmatprep.subr.mxu0 0.0
          %865 = vmatpush1.msra.mxu0 0.0
          %866 = vmatprep.subr.mxu0 0.0
          %867 = vmatpush1.msra.mxu0 0.0
          %868 = vmatprep.subr.mxu0 0.0
          %869 = vmatpush1.msra.mxu0 0.0
          %870 = vmatprep.subr.mxu0 0.0
          %871 = vmatpush1.msra.mxu0 0.0
          %872 = vmatprep.subr.mxu0 0.0
          %873 = vmatpush1.msra.mxu0 0.0
          %874 = vmatprep.subr.mxu0 0.0
          %875 = vmatpush1.msra.mxu0 0.0
          %876 = vmatprep.subr.mxu0 0.0
          %877 = vmatpush1.msra.mxu0 %v841
          %878 = vmatprep.subr.mxu0 0.0
          %879 = vmatpush2.msra.mxu0 0.0
          %880 = vmatprep.subr.mxu0 0.0
          %881 = vmatpush2.msra.mxu0 0.0
          %882 = vmatprep.subr.mxu0 0.0
          %883 = vmatpush2.msra.mxu0 0.0
          %884 = vmatprep.subr.mxu0 0.0
          %885 = vmatpush2.msra.mxu0 0.0
          %886 = vmatprep.subr.mxu0 0.0
          %887 = vmatpush2.msra.mxu0 0.0
          %888 = vmatprep.subr.mxu0 0.0
          %889 = vmatpush2.msra.mxu0 0.0
          %890 = vmatprep.subr.mxu0 0.0
          %891 = vmatpush2.msra.mxu0 0.0
          %892 = vmatprep.subr.mxu0 0.0
          %893 = vmatpush2.msra.mxu0 0.0
          %894 = vmatprep.subr.mxu0 0.0
          %895 = vmatpush2.msra.mxu0 0.0
          %896 = vmatprep.subr.mxu0 0.0
          %897 = vmatpush2.msra.mxu0 0.0
          %898 = vmatprep.subr.mxu0 0.0
          %899 = vmatpush2.msra.mxu0 0.0
          %900 = vmatprep.subr.mxu0 0.0
          %901 = vmatpush2.msra.mxu0 0.0
          %902 = vmatprep.subr.mxu0 0.0
          %903 = vmatpush2.msra.mxu0 0.0
          %904 = vmatprep.subr.mxu0 0.0
          %905 = vmatpush2.msra.mxu0 0.0
          %906 = vmatprep.subr.mxu0 0.0
          %907 = vmatpush2.msra.mxu0 0.0
          %908 = vmatprep.subr.mxu0 0.0
          %909 = vmatpush2.msra.mxu0 0.0
          %910 = vmatprep.mubr.f32.mxu0 0.0
          %911 = vmatmul.mubr.f32.gmra.mxu0 %v844
          %v912 = vpop.f32.mrf.mxu0
          %v913 = vadd.f32 0.0, %v912
          %v914 = vpop.f32.mrf.mxu0
          %915 = vdwg.mxu0
          %v916 = vadd.f32 %v839, %v913
        $region80: #{tpu_custom_call.1} parent=47 // loop_footer
          %s737 = sadd.s32 1, %s733
        $region81: #{tpu_custom_call.1} parent=47 // loop_footer_branch
          %732 = sbr.rel target = $region77
        $region82: #{tpu_custom_call.1} parent=47 // loop_exit
          _
        %v917 = vrcp.pop %v739
        %v918 = vmul.f32 1.0, %v917
        %v919 = vmul.f32 %v740, %v918
        %921 = vrot.lane.b32.xlu0 %v919, 8
        %v922 = vpop.permute.xlu0 %921
        %vm924 = vcmask 130112
        %925 = vst.msk [vmem:[#allocation3] sm:$0xff] %vm924, %v922
        loop: start=0, step=1, limit=2
        $region83: #{tpu_custom_call.1} parent=47 // loop_pre_header
          _
        $region84: #{tpu_custom_call.1} parent=47 // loop_header
          %s927 = sphi 0, %s931
          %p928 = scmp.ge.s32.totalorder %s927, 2
          %v932 = vphi -inf, %v1021
          %v933 = vphi 0.0, %v1032
          %v934 = vphi 0.0, %v1110
        $region85: #{tpu_custom_call.1} parent=47 // loop_header_branch
          %930 = sbr.rel (%p928) target = $region89
        $region86: #{tpu_custom_call.1} parent=47 // loop_body
          %s935 = smul.u32 %s927, 8
          %s936 = scalar_lea.vmem [#allocation2], %s935
          %v937 = vld [vmem:[%s936] sm:$0xff]
          %939 = vrot.lane.b32.xlu0 %v542, 112
          %v940 = vpop.permute.xlu0 %939
          %942 = vrot.lane.b32.xlu0 %v937, 112
          %v943 = vpop.permute.xlu0 %942
          %v944 = vsel %vm730, %v940, 0
          %v946 = vsel %vm730, %v943, 0
          %948 = vmatprep.subr.mxu0 0.0
          %949 = vmatpush1.xpose.msra.mxu0 0.0
          %950 = vmatprep.subr.mxu0 0.0
          %951 = vmatpush1.xpose.msra.mxu0 0.0
          %952 = vmatprep.subr.mxu0 0.0
          %953 = vmatpush1.xpose.msra.mxu0 0.0
          %954 = vmatprep.subr.mxu0 0.0
          %955 = vmatpush1.xpose.msra.mxu0 0.0
          %956 = vmatprep.subr.mxu0 0.0
          %957 = vmatpush1.xpose.msra.mxu0 0.0
          %958 = vmatprep.subr.mxu0 0.0
          %959 = vmatpush1.xpose.msra.mxu0 0.0
          %960 = vmatprep.subr.mxu0 0.0
          %961 = vmatpush1.xpose.msra.mxu0 0.0
          %962 = vmatprep.subr.mxu0 0.0
          %963 = vmatpush1.xpose.msra.mxu0 0.0
          %964 = vmatprep.subr.mxu0 0.0
          %965 = vmatpush1.xpose.msra.mxu0 0.0
          %966 = vmatprep.subr.mxu0 0.0
          %967 = vmatpush1.xpose.msra.mxu0 0.0
          %968 = vmatprep.subr.mxu0 0.0
          %969 = vmatpush1.xpose.msra.mxu0 0.0
          %970 = vmatprep.subr.mxu0 0.0
          %971 = vmatpush1.xpose.msra.mxu0 0.0
          %972 = vmatprep.subr.mxu0 0.0
          %973 = vmatpush1.xpose.msra.mxu0 0.0
          %974 = vmatprep.subr.mxu0 0.0
          %975 = vmatpush1.xpose.msra.mxu0 0.0
          %976 = vmatprep.subr.mxu0 0.0
          %977 = vmatpush1.xpose.msra.mxu0 0.0
          %978 = vmatprep.subr.mxu0 0.0
          %979 = vmatpush1.xpose.msra.mxu0 %v946
          %980 = vmatprep.subr.mxu0 0.0
          %981 = vmatpush2.xpose.msra.mxu0 0.0
          %982 = vmatprep.subr.mxu0 0.0
          %983 = vmatpush2.xpose.msra.mxu0 0.0
          %984 = vmatprep.subr.mxu0 0.0
          %985 = vmatpush2.xpose.msra.mxu0 0.0
          %986 = vmatprep.subr.mxu0 0.0
          %987 = vmatpush2.xpose.msra.mxu0 0.0
          %988 = vmatprep.subr.mxu0 0.0
          %989 = vmatpush2.xpose.msra.mxu0 0.0
          %990 = vmatprep.subr.mxu0 0.0
          %991 = vmatpush2.xpose.msra.mxu0 0.0
          %992 = vmatprep.subr.mxu0 0.0
          %993 = vmatpush2.xpose.msra.mxu0 0.0
          %994 = vmatprep.subr.mxu0 0.0
          %995 = vmatpush2.xpose.msra.mxu0 0.0
          %996 = vmatprep.subr.mxu0 0.0
          %997 = vmatpush2.xpose.msra.mxu0 0.0
          %998 = vmatprep.subr.mxu0 0.0
          %999 = vmatpush2.xpose.msra.mxu0 0.0
          %1000 = vmatprep.subr.mxu0 0.0
          %1001 = vmatpush2.xpose.msra.mxu0 0.0
          %1002 = vmatprep.subr.mxu0 0.0
          %1003 = vmatpush2.xpose.msra.mxu0 0.0
          %1004 = vmatprep.subr.mxu0 0.0
          %1005 = vmatpush2.xpose.msra.mxu0 0.0
          %1006 = vmatprep.subr.mxu0 0.0
          %1007 = vmatpush2.xpose.msra.mxu0 0.0
          %1008 = vmatprep.subr.mxu0 0.0
          %1009 = vmatpush2.xpose.msra.mxu0 0.0
          %1010 = vmatprep.subr.mxu0 0.0
          %1011 = vmatpush2.xpose.msra.mxu0 0.0
          %1012 = vmatprep.mubr.f32.mxu0 0.0
          %1013 = vmatmul.mubr.f32.gmra.mxu0 %v944
          %v1014 = vpop.f32.mrf.mxu0
          %v1015 = vadd.f32 0.0, %v1014
          %v1016 = vpop.f32.mrf.mxu0
          %1017 = vdwg.mxu0
          %v1018 = vsel %vm730, %v1015, -inf
          %1019 = vmax.xlane.f32.xlu0 %v1018
          %v1020 = vpop.xlane.xlu0 %1019
          %v1021 = vmax.f32 %v932, %v1020
          %v1022 = vsub.f32 %v932, %v1021
          %v1023 = vmul.f32 %v1022, 1.442695
          %v1024 = vpow.pop %v1023
          %v1025 = vsub.f32 %v1015, %v1021
          %v1026 = vmul.f32 %v1025, 1.442695
          %v1027 = vpow.pop %v1026
          %v1028 = vmul.f32 %v1024, %v933
          %v1029 = vsel %vm730, %v1027, 0.0
          %1030 = vadd.xlane.f32.xlu0 %v1029
          %v1031 = vpop.xlane.xlu0 %1030
          %v1032 = vadd.f32 %v1028, %v1031
          %v1033 = vmul.f32 %v1024, %v934
          %1034 = vrot.lane.b32.xlu0 %v937, 80
          %v1035 = vpop.permute.xlu0 %1034
          %v1038 = vsel %vm730, %v1027, 0
          %1040 = vmatprep.subr.mxu0 0.0
          %1041 = vmatpush1.msra.mxu0 0.0
          %1042 = vmatprep.subr.mxu0 0.0
          %1043 = vmatpush1.msra.mxu0 0.0
          %1044 = vmatprep.subr.mxu0 0.0
          %1045 = vmatpush1.msra.mxu0 0.0
          %1046 = vmatprep.subr.mxu0 0.0
          %1047 = vmatpush1.msra.mxu0 0.0
          %1048 = vmatprep.subr.mxu0 0.0
          %1049 = vmatpush1.msra.mxu0 0.0
          %1050 = vmatprep.subr.mxu0 0.0
          %1051 = vmatpush1.msra.mxu0 0.0
          %1052 = vmatprep.subr.mxu0 0.0
          %1053 = vmatpush1.msra.mxu0 0.0
          %1054 = vmatprep.subr.mxu0 0.0
          %1055 = vmatpush1.msra.mxu0 0.0
          %1056 = vmatprep.subr.mxu0 0.0
          %1057 = vmatpush1.msra.mxu0 0.0
          %1058 = vmatprep.subr.mxu0 0.0
          %1059 = vmatpush1.msra.mxu0 0.0
          %1060 = vmatprep.subr.mxu0 0.0
          %1061 = vmatpush1.msra.mxu0 0.0
          %1062 = vmatprep.subr.mxu0 0.0
          %1063 = vmatpush1.msra.mxu0 0.0
          %1064 = vmatprep.subr.mxu0 0.0
          %1065 = vmatpush1.msra.mxu0 0.0
          %1066 = vmatprep.subr.mxu0 0.0
          %1067 = vmatpush1.msra.mxu0 0.0
          %1068 = vmatprep.subr.mxu0 0.0
          %1069 = vmatpush1.msra.mxu0 0.0
          %1070 = vmatprep.subr.mxu0 0.0
          %1071 = vmatpush1.msra.mxu0 %v1035
          %1072 = vmatprep.subr.mxu0 0.0
          %1073 = vmatpush2.msra.mxu0 0.0
          %1074 = vmatprep.subr.mxu0 0.0
          %1075 = vmatpush2.msra.mxu0 0.0
          %1076 = vmatprep.subr.mxu0 0.0
          %1077 = vmatpush2.msra.mxu0 0.0
          %1078 = vmatprep.subr.mxu0 0.0
          %1079 = vmatpush2.msra.mxu0 0.0
          %1080 = vmatprep.subr.mxu0 0.0
          %1081 = vmatpush2.msra.mxu0 0.0
          %1082 = vmatprep.subr.mxu0 0.0
          %1083 = vmatpush2.msra.mxu0 0.0
          %1084 = vmatprep.subr.mxu0 0.0
          %1085 = vmatpush2.msra.mxu0 0.0
          %1086 = vmatprep.subr.mxu0 0.0
          %1087 = vmatpush2.msra.mxu0 0.0
          %1088 = vmatprep.subr.mxu0 0.0
          %1089 = vmatpush2.msra.mxu0 0.0
          %1090 = vmatprep.subr.mxu0 0.0
          %1091 = vmatpush2.msra.mxu0 0.0
          %1092 = vmatprep.subr.mxu0 0.0
          %1093 = vmatpush2.msra.mxu0 0.0
          %1094 = vmatprep.subr.mxu0 0.0
          %1095 = vmatpush2.msra.mxu0 0.0
          %1096 = vmatprep.subr.mxu0 0.0
          %1097 = vmatpush2.msra.mxu0 0.0
          %1098 = vmatprep.subr.mxu0 0.0
          %1099 = vmatpush2.msra.mxu0 0.0
          %1100 = vmatprep.subr.mxu0 0.0
          %1101 = vmatpush2.msra.mxu0 0.0
          %1102 = vmatprep.subr.mxu0 0.0
          %1103 = vmatpush2.msra.mxu0 0.0
          %1104 = vmatprep.mubr.f32.mxu0 0.0
          %1105 = vmatmul.mubr.f32.gmra.mxu0 %v1038
          %v1106 = vpop.f32.mrf.mxu0
          %v1107 = vadd.f32 0.0, %v1106
          %v1108 = vpop.f32.mrf.mxu0
          %1109 = vdwg.mxu0
          %v1110 = vadd.f32 %v1033, %v1107
        $region87: #{tpu_custom_call.1} parent=47 // loop_footer
          %s931 = sadd.s32 1, %s927
        $region88: #{tpu_custom_call.1} parent=47 // loop_footer_branch
          %926 = sbr.rel target = $region84
        $region89: #{tpu_custom_call.1} parent=47 // loop_exit
          _
        %v1111 = vrcp.pop %v933
        %v1112 = vmul.f32 1.0, %v1111
        %v1113 = vmul.f32 %v934, %v1112
        %1115 = vrot.lane.b32.xlu0 %v1113, 16
        %v1116 = vpop.permute.xlu0 %1115
        %vm1118 = vcmask 195712
        %1119 = vst.msk [vmem:[#allocation3] sm:$0xff] %vm1118, %v1116
        loop: start=0, step=1, limit=2
        $region90: #{tpu_custom_call.1} parent=47 // loop_pre_header
          _
        $region91: #{tpu_custom_call.1} parent=47 // loop_header
          %s1121 = sphi 0, %s1125
          %p1122 = scmp.ge.s32.totalorder %s1121, 2
          %v1126 = vphi -inf, %v1215
          %v1127 = vphi 0.0, %v1226
          %v1128 = vphi 0.0, %v1304
        $region92: #{tpu_custom_call.1} parent=47 // loop_header_branch
          %1124 = sbr.rel (%p1122) target = $region96
        $region93: #{tpu_custom_call.1} parent=47 // loop_body
          %s1129 = smul.u32 %s1121, 8
          %s1130 = scalar_lea.vmem [#allocation2], %s1129
          %v1131 = vld [vmem:[%s1130] sm:$0xff]
          %1133 = vrot.lane.b32.xlu0 %v542, 104
          %v1134 = vpop.permute.xlu0 %1133
          %1136 = vrot.lane.b32.xlu0 %v1131, 104
          %v1137 = vpop.permute.xlu0 %1136
          %v1138 = vsel %vm730, %v1134, 0
          %v1140 = vsel %vm730, %v1137, 0
          %1142 = vmatprep.subr.mxu0 0.0
          %1143 = vmatpush1.xpose.msra.mxu0 0.0
          %1144 = vmatprep.subr.mxu0 0.0
          %1145 = vmatpush1.xpose.msra.mxu0 0.0
          %1146 = vmatprep.subr.mxu0 0.0
          %1147 = vmatpush1.xpose.msra.mxu0 0.0
          %1148 = vmatprep.subr.mxu0 0.0
          %1149 = vmatpush1.xpose.msra.mxu0 0.0
          %1150 = vmatprep.subr.mxu0 0.0
          %1151 = vmatpush1.xpose.msra.mxu0 0.0
          %1152 = vmatprep.subr.mxu0 0.0
          %1153 = vmatpush1.xpose.msra.mxu0 0.0
          %1154 = vmatprep.subr.mxu0 0.0
          %1155 = vmatpush1.xpose.msra.mxu0 0.0
          %1156 = vmatprep.subr.mxu0 0.0
          %1157 = vmatpush1.xpose.msra.mxu0 0.0
          %1158 = vmatprep.subr.mxu0 0.0
          %1159 = vmatpush1.xpose.msra.mxu0 0.0
          %1160 = vmatprep.subr.mxu0 0.0
          %1161 = vmatpush1.xpose.msra.mxu0 0.0
          %1162 = vmatprep.subr.mxu0 0.0
          %1163 = vmatpush1.xpose.msra.mxu0 0.0
          %1164 = vmatprep.subr.mxu0 0.0
          %1165 = vmatpush1.xpose.msra.mxu0 0.0
          %1166 = vmatprep.subr.mxu0 0.0
          %1167 = vmatpush1.xpose.msra.mxu0 0.0
          %1168 = vmatprep.subr.mxu0 0.0
          %1169 = vmatpush1.xpose.msra.mxu0 0.0
          %1170 = vmatprep.subr.mxu0 0.0
          %1171 = vmatpush1.xpose.msra.mxu0 0.0
          %1172 = vmatprep.subr.mxu0 0.0
          %1173 = vmatpush1.xpose.msra.mxu0 %v1140
          %1174 = vmatprep.subr.mxu0 0.0
          %1175 = vmatpush2.xpose.msra.mxu0 0.0
          %1176 = vmatprep.subr.mxu0 0.0
          %1177 = vmatpush2.xpose.msra.mxu0 0.0
          %1178 = vmatprep.subr.mxu0 0.0
          %1179 = vmatpush2.xpose.msra.mxu0 0.0
          %1180 = vmatprep.subr.mxu0 0.0
          %1181 = vmatpush2.xpose.msra.mxu0 0.0
          %1182 = vmatprep.subr.mxu0 0.0
          %1183 = vmatpush2.xpose.msra.mxu0 0.0
          %1184 = vmatprep.subr.mxu0 0.0
          %1185 = vmatpush2.xpose.msra.mxu0 0.0
          %1186 = vmatprep.subr.mxu0 0.0
          %1187 = vmatpush2.xpose.msra.mxu0 0.0
          %1188 = vmatprep.subr.mxu0 0.0
          %1189 = vmatpush2.xpose.msra.mxu0 0.0
          %1190 = vmatprep.subr.mxu0 0.0
          %1191 = vmatpush2.xpose.msra.mxu0 0.0
          %1192 = vmatprep.subr.mxu0 0.0
          %1193 = vmatpush2.xpose.msra.mxu0 0.0
          %1194 = vmatprep.subr.mxu0 0.0
          %1195 = vmatpush2.xpose.msra.mxu0 0.0
          %1196 = vmatprep.subr.mxu0 0.0
          %1197 = vmatpush2.xpose.msra.mxu0 0.0
          %1198 = vmatprep.subr.mxu0 0.0
          %1199 = vmatpush2.xpose.msra.mxu0 0.0
          %1200 = vmatprep.subr.mxu0 0.0
          %1201 = vmatpush2.xpose.msra.mxu0 0.0
          %1202 = vmatprep.subr.mxu0 0.0
          %1203 = vmatpush2.xpose.msra.mxu0 0.0
          %1204 = vmatprep.subr.mxu0 0.0
          %1205 = vmatpush2.xpose.msra.mxu0 0.0
          %1206 = vmatprep.mubr.f32.mxu0 0.0
          %1207 = vmatmul.mubr.f32.gmra.mxu0 %v1138
          %v1208 = vpop.f32.mrf.mxu0
          %v1209 = vadd.f32 0.0, %v1208
          %v1210 = vpop.f32.mrf.mxu0
          %1211 = vdwg.mxu0
          %v1212 = vsel %vm730, %v1209, -inf
          %1213 = vmax.xlane.f32.xlu0 %v1212
          %v1214 = vpop.xlane.xlu0 %1213
          %v1215 = vmax.f32 %v1126, %v1214
          %v1216 = vsub.f32 %v1126, %v1215
          %v1217 = vmul.f32 %v1216, 1.442695
          %v1218 = vpow.pop %v1217
          %v1219 = vsub.f32 %v1209, %v1215
          %v1220 = vmul.f32 %v1219, 1.442695
          %v1221 = vpow.pop %v1220
          %v1222 = vmul.f32 %v1218, %v1127
          %v1223 = vsel %vm730, %v1221, 0.0
          %1224 = vadd.xlane.f32.xlu0 %v1223
          %v1225 = vpop.xlane.xlu0 %1224
          %v1226 = vadd.f32 %v1222, %v1225
          %v1227 = vmul.f32 %v1218, %v1128
          %1228 = vrot.lane.b32.xlu0 %v1131, 72
          %v1229 = vpop.permute.xlu0 %1228
          %v1232 = vsel %vm730, %v1221, 0
          %1234 = vmatprep.subr.mxu0 0.0
          %1235 = vmatpush1.msra.mxu0 0.0
          %1236 = vmatprep.subr.mxu0 0.0
          %1237 = vmatpush1.msra.mxu0 0.0
          %1238 = vmatprep.subr.mxu0 0.0
          %1239 = vmatpush1.msra.mxu0 0.0
          %1240 = vmatprep.subr.mxu0 0.0
          %1241 = vmatpush1.msra.mxu0 0.0
          %1242 = vmatprep.subr.mxu0 0.0
          %1243 = vmatpush1.msra.mxu0 0.0
          %1244 = vmatprep.subr.mxu0 0.0
          %1245 = vmatpush1.msra.mxu0 0.0
          %1246 = vmatprep.subr.mxu0 0.0
          %1247 = vmatpush1.msra.mxu0 0.0
          %1248 = vmatprep.subr.mxu0 0.0
          %1249 = vmatpush1.msra.mxu0 0.0
          %1250 = vmatprep.subr.mxu0 0.0
          %1251 = vmatpush1.msra.mxu0 0.0
          %1252 = vmatprep.subr.mxu0 0.0
          %1253 = vmatpush1.msra.mxu0 0.0
          %1254 = vmatprep.subr.mxu0 0.0
          %1255 = vmatpush1.msra.mxu0 0.0
          %1256 = vmatprep.subr.mxu0 0.0
          %1257 = vmatpush1.msra.mxu0 0.0
          %1258 = vmatprep.subr.mxu0 0.0
          %1259 = vmatpush1.msra.mxu0 0.0
          %1260 = vmatprep.subr.mxu0 0.0
          %1261 = vmatpush1.msra.mxu0 0.0
          %1262 = vmatprep.subr.mxu0 0.0
          %1263 = vmatpush1.msra.mxu0 0.0
          %1264 = vmatprep.subr.mxu0 0.0
          %1265 = vmatpush1.msra.mxu0 %v1229
          %1266 = vmatprep.subr.mxu0 0.0
          %1267 = vmatpush2.msra.mxu0 0.0
          %1268 = vmatprep.subr.mxu0 0.0
          %1269 = vmatpush2.msra.mxu0 0.0
          %1270 = vmatprep.subr.mxu0 0.0
          %1271 = vmatpush2.msra.mxu0 0.0
          %1272 = vmatprep.subr.mxu0 0.0
          %1273 = vmatpush2.msra.mxu0 0.0
          %1274 = vmatprep.subr.mxu0 0.0
          %1275 = vmatpush2.msra.mxu0 0.0
          %1276 = vmatprep.subr.mxu0 0.0
          %1277 = vmatpush2.msra.mxu0 0.0
          %1278 = vmatprep.subr.mxu0 0.0
          %1279 = vmatpush2.msra.mxu0 0.0
          %1280 = vmatprep.subr.mxu0 0.0
          %1281 = vmatpush2.msra.mxu0 0.0
          %1282 = vmatprep.subr.mxu0 0.0
          %1283 = vmatpush2.msra.mxu0 0.0
          %1284 = vmatprep.subr.mxu0 0.0
          %1285 = vmatpush2.msra.mxu0 0.0
          %1286 = vmatprep.subr.mxu0 0.0
          %1287 = vmatpush2.msra.mxu0 0.0
          %1288 = vmatprep.subr.mxu0 0.0
          %1289 = vmatpush2.msra.mxu0 0.0
          %1290 = vmatprep.subr.mxu0 0.0
          %1291 = vmatpush2.msra.mxu0 0.0
          %1292 = vmatprep.subr.mxu0 0.0
          %1293 = vmatpush2.msra.mxu0 0.0
          %1294 = vmatprep.subr.mxu0 0.0
          %1295 = vmatpush2.msra.mxu0 0.0
          %1296 = vmatprep.subr.mxu0 0.0
          %1297 = vmatpush2.msra.mxu0 0.0
          %1298 = vmatprep.mubr.f32.mxu0 0.0
          %1299 = vmatmul.mubr.f32.gmra.mxu0 %v1232
          %v1300 = vpop.f32.mrf.mxu0
          %v1301 = vadd.f32 0.0, %v1300
          %v1302 = vpop.f32.mrf.mxu0
          %1303 = vdwg.mxu0
          %v1304 = vadd.f32 %v1227, %v1301
        $region94: #{tpu_custom_call.1} parent=47 // loop_footer
          %s1125 = sadd.s32 1, %s1121
        $region95: #{tpu_custom_call.1} parent=47 // loop_footer_branch
          %1120 = sbr.rel target = $region91
        $region96: #{tpu_custom_call.1} parent=47 // loop_exit
          _
        %v1305 = vrcp.pop %v1127
        %v1306 = vmul.f32 1.0, %v1305
        %v1307 = vmul.f32 %v1128, %v1306
        %1309 = vrot.lane.b32.xlu0 %v1307, 24
        %v1310 = vpop.permute.xlu0 %1309
        %vm1312 = vcmask 261312
        %1313 = vst.msk [vmem:[#allocation3] sm:$0xff] %vm1312, %v1310
        %v1314 = vld [vmem:[#allocation3] sm:$0xff]
        %v1315 = vld [vmem:[#allocation10] sm:$0xff]
        %v1316 = vld [vmem:[#allocation10 + $0x8] sm:$0xff]
        %v1317 = vld [vmem:[#allocation10 + $0x10] sm:$0xff]
        %v1318 = vld [vmem:[#allocation10 + $0x18] sm:$0xff]
        %v1319 = vld [vmem:[%s6] sm:$0x1]
        %v1321 = vlaneseq
        %v1322 = vshrl.u32 %v1321, 7
        %v1323 = vsub.s32 0, %v1322
        %v1324 = vrot.slane %v1319, %v1323
        %v1327 = vsel %vm471, %v1314, 0
        %1329 = vmatprep.subr.mxu0 0.0
        %1330 = vmatpush1.msra.mxu0 0.0
        %1331 = vmatprep.subr.mxu0 0.0
        %1332 = vmatpush1.msra.mxu0 0.0
        %1333 = vmatprep.subr.mxu0 0.0
        %1334 = vmatpush1.msra.mxu0 0.0
        %1335 = vmatprep.subr.mxu0 0.0
        %1336 = vmatpush1.msra.mxu0 0.0
        %1337 = vmatprep.subr.mxu0 0.0
        %1338 = vmatpush1.msra.mxu0 0.0
        %1339 = vmatprep.subr.mxu0 0.0
        %1340 = vmatpush1.msra.mxu0 0.0
        %1341 = vmatprep.subr.mxu0 0.0
        %1342 = vmatpush1.msra.mxu0 0.0
        %1343 = vmatprep.subr.mxu0 0.0
        %1344 = vmatpush1.msra.mxu0 0.0
        %1345 = vmatprep.subr.mxu0 0.0
        %1346 = vmatpush1.msra.mxu0 0.0
        %1347 = vmatprep.subr.mxu0 0.0
        %1348 = vmatpush1.msra.mxu0 0.0
        %1349 = vmatprep.subr.mxu0 0.0
        %1350 = vmatpush1.msra.mxu0 0.0
        %1351 = vmatprep.subr.mxu0 0.0
        %1352 = vmatpush1.msra.mxu0 0.0
        %1353 = vmatprep.subr.mxu0 0.0
        %1354 = vmatpush1.msra.mxu0 %v1318
        %1355 = vmatprep.subr.mxu0 0.0
        %1356 = vmatpush1.msra.mxu0 %v1317
        %1357 = vmatprep.subr.mxu0 0.0
        %1358 = vmatpush1.msra.mxu0 %v1316
        %1359 = vmatprep.subr.mxu0 0.0
        %1360 = vmatpush1.msra.mxu0 %v1315
        %1361 = vmatprep.subr.mxu0 0.0
        %1362 = vmatpush2.msra.mxu0 0.0
        %1363 = vmatprep.subr.mxu0 0.0
        %1364 = vmatpush2.msra.mxu0 0.0
        %1365 = vmatprep.subr.mxu0 0.0
        %1366 = vmatpush2.msra.mxu0 0.0
        %1367 = vmatprep.subr.mxu0 0.0
        %1368 = vmatpush2.msra.mxu0 0.0
        %1369 = vmatprep.subr.mxu0 0.0
        %1370 = vmatpush2.msra.mxu0 0.0
        %1371 = vmatprep.subr.mxu0 0.0
        %1372 = vmatpush2.msra.mxu0 0.0
        %1373 = vmatprep.subr.mxu0 0.0
        %1374 = vmatpush2.msra.mxu0 0.0
        %1375 = vmatprep.subr.mxu0 0.0
        %1376 = vmatpush2.msra.mxu0 0.0
        %1377 = vmatprep.subr.mxu0 0.0
        %1378 = vmatpush2.msra.mxu0 0.0
        %1379 = vmatprep.subr.mxu0 0.0
        %1380 = vmatpush2.msra.mxu0 0.0
        %1381 = vmatprep.subr.mxu0 0.0
        %1382 = vmatpush2.msra.mxu0 0.0
        %1383 = vmatprep.subr.mxu0 0.0
        %1384 = vmatpush2.msra.mxu0 0.0
        %1385 = vmatprep.subr.mxu0 0.0
        %1386 = vmatpush2.msra.mxu0 0.0
        %1387 = vmatprep.subr.mxu0 0.0
        %1388 = vmatpush2.msra.mxu0 0.0
        %1389 = vmatprep.subr.mxu0 0.0
        %1390 = vmatpush2.msra.mxu0 0.0
        %1391 = vmatprep.subr.mxu0 0.0
        %1392 = vmatpush2.msra.mxu0 0.0
        %1393 = vmatprep.mubr.f32.mxu0 0.0
        %1394 = vmatmul.mubr.f32.gmra.mxu0 %v1327
        %v1395 = vpop.f32.mrf.mxu0
        %v1396 = vadd.f32 %v1324, %v1395
        %v1397 = vpop.f32.mrf.mxu0
        %1398 = vdwg.mxu0
        %1399 = vst.msk [vmem:[%s354] sm:$0xff] %vm471, %v1396
        %s1400 = sand.u32 %s200, 1
        %s1401 = scalar_lea.sflag [#allocation6], %s1400
        %s1402 = sand.u32 %s200, 1
        %s1403 = smul.addr %s1402, 8
        %s1404 = scalar_lea.vmem [#allocation12], %s1403
        // Predicated region
        $region97: #{tpu_custom_call.1} parent=47 // pred_check
          %p1405 = pneg %p210
        $region98: #{tpu_custom_call.1} parent=47 // pred_check_branch
          %1407 = sbr.rel (%p1405) target = $region100
        $region99: #{tpu_custom_call.1} parent=47 // pred_region
          %s1409 = ssub.s32 128, 128
          %1410 = vsyncadd %s1401, %s1409
          %s1411 = smul.addr %s30, 2
          %s1412 = sadd.s32 %s31, %s1411
          %s1413 = smul.addr %s1412, 128
          %s1414 = scalar_lea.hbm %s7, %s1413
          %s1416 = sshll.u32 %s1404, 4
          %s1417 = int_to_ptr.vmem [resolvable:$true] %s1416
          %1419 = dma.vmem_to_hbm [thread:$0]  %s1417, 128, %s1414, %s1401
        $region100: #{tpu_custom_call.1} parent=47 // pred_fallthru
          _
      $region48: #{tpu_custom_call.1} parent=5 // pred_fallthru
        _
      %p1420 = scmp.le.s32.totalorder 2, %s21
      // Predicated region
      $region101: #{tpu_custom_call.1} parent=5 // pred_check
        %p1421 = pneg %p1420
      $region102: #{tpu_custom_call.1} parent=5 // pred_check_branch
        %1423 = sbr.rel (%p1421) target = $region104
      $region103: #{tpu_custom_call.1} parent=5 // pred_region
        %s1424 = ssub.s32 %s21, 2
        // Predicated region
        $region105: #{tpu_custom_call.1} parent=103 // pred_check
          %p1425 = pneg %p216
        $region106: #{tpu_custom_call.1} parent=103 // pred_check_branch
          %1427 = sbr.rel (%p1425) target = $region108
        $region107: #{tpu_custom_call.1} parent=103 // pred_region
          %s1428 = sand.u32 %s201, 1
          %s1429 = scalar_lea.sflag [#allocation6], %s1428
          %s1430 = sand.u32 %s201, 1
          %s1431 = smul.addr %s1430, 8
          %s1432 = scalar_lea.vmem [#allocation12], %s1431
          %1433 = dma.done %s1429, 128
        $region108: #{tpu_custom_call.1} parent=103 // pred_fallthru
          _
      $region104: #{tpu_custom_call.1} parent=5 // pred_fallthru
        _
    $region6: #{tpu_custom_call.1} parent=1 // loop_footer
      %s25 = sadd.s32 1, %s21
    $region7: #{tpu_custom_call.1} parent=1 // loop_footer_branch
      %20 = sbr.rel target = $region3
    $region8: #{tpu_custom_call.1} parent=1 // loop_exit
      _
    %1434 = vsyncpa [#allocation5], 1
    %s1435 = scalar_lea.sflag [#allocation5], 1
    %1436 = vsyncpa %s1435, 1
    %1437 = vsyncpa [#allocation8], 1
    %1438 = vsyncpa [#allocation11], 1
    %1439 = vsyncpa [#allocation6], 1
    %s1440 = scalar_lea.sflag [#allocation6], 1
    %1441 = vsyncpa %s1440, 1

</llo_original>
